<compile_context>
chip_gen: v7x
topology: tpu7x:2x2x1
jax: 0.10.0
libtpu: 0.0.40
codegen_flags: <defaults>
</compile_context>

<pallas_src>
import functools

import jax
import jax.numpy as jnp
from jax import lax
from jax.experimental import pallas as pl
from jax.experimental.pallas import tpu as pltpu

_HAS_BUFFERED = hasattr(pl, "Buffered")


def _round_up(n, m):
    return ((n + m - 1) // m) * m


def _vmem_budget_bytes():
    """Generation-aware per-core VMEM budget (~80% of capacity).

    v5e/v6e (128 MiB) -> ~102 MiB, v7x (64 MiB per TC) -> ~51 MiB.  Falls back
    to the v7x-safe figure if the hardware query is unavailable.
    """
    try:
        capacity = int(pltpu.get_tpu_info().vmem_capacity_bytes)
    except Exception:
        capacity = 64 << 20
    return max(32 << 20, int(capacity * 0.8))


def _activation(v, act):
    if act == "lrelu":
        # PyTorch nn.LeakyReLU default negative_slope = 0.01
        return jnp.where(v >= 0, v, 0.01 * v)
    return jnp.maximum(v, 0.0)  # nn.ReLU (default for unknown act, like get_act)


# --------------------------------------------------------------------------- #
# Kernels
# --------------------------------------------------------------------------- #
def _mlp_resident_kernel(x_ref, win_ref, bin_ref, w1_ref, b1_ref, w2_ref, b2_ref,
                         o_ref, *, n_blocks, act):
    """All weights VMEM-resident: input linear + n_blocks residual blocks."""
    mxu_dtype = win_ref.dtype  # MXU input dtype (f32 or bf16)

    h = jnp.dot(x_ref[...], win_ref[...], preferred_element_type=jnp.float32)
    h = h + bin_ref[...].astype(jnp.float32)

    def block(l, h):
        y = jnp.dot(h.astype(mxu_dtype), w1_ref[l],
                    preferred_element_type=jnp.float32)
        y = _activation(y + b1_ref[l].astype(jnp.float32), act)
        y = jnp.dot(y.astype(mxu_dtype), w2_ref[l],
                    preferred_element_type=jnp.float32)
        y = _activation(y + b2_ref[l].astype(jnp.float32), act)
        return h + y

    if n_blocks > 0:
        # fori_loop keeps trace size / register pressure constant in n_blocks;
        # fully unroll only short fixed trip counts for scheduler visibility.
        h = lax.fori_loop(0, n_blocks, block, h, unroll=n_blocks <= 4)

    o_ref[...] = h.astype(o_ref.dtype)


def _mlp_stream_kernel(x_ref, win_ref, bin_ref, w1_hbm, b1_ref, w2_hbm, b2_ref,
                       o_ref, w1_buf, w2_buf, sem, *, n_blocks, act):
    """Block weights streamed from HBM with manual double-buffering (v7x path).

    w1_hbm / w2_hbm: (n_blocks, c_h_p, c_h_p) in HBM (memory_space=pl.ANY).
    w1_buf / w2_buf: (2, c_h_p, c_h_p) VMEM ping-pong buffers; sem: DMA (2, 2).
    """
    mxu_dtype = win_ref.dtype

    def start_fetch(l, slot):
        pltpu.make_async_copy(w1_hbm.at[l], w1_buf.at[slot], sem.at[0, slot]).start()
        pltpu.make_async_copy(w2_hbm.at[l], w2_buf.at[slot], sem.at[1, slot]).start()

    def wait_fetch(slot):
        pltpu.make_async_copy(w1_hbm.at[0], w1_buf.at[slot], sem.at[0, slot]).wait()
        pltpu.make_async_copy(w2_hbm.at[0], w2_buf.at[slot], sem.at[1, slot]).wait()

    if n_blocks > 0:
        start_fetch(0, 0)  # block-0 weight DMA overlaps the input dense layer

    h = jnp.dot(x_ref[...], win_ref[...], preferred_element_type=jnp.float32)
    h = h + bin_ref[...].astype(jnp.float32)

    def block(l, h):
        slot = l & 1
        wait_fetch(slot)

        @pl.when(l + 1 < n_blocks)
        def _():
            start_fetch(l + 1, 1 - slot)  # prefetch next block while computing

        y = jnp.dot(h.astype(mxu_dtype), w1_buf[slot],
                    preferred_element_type=jnp.float32)
        y = _activation(y + b1_ref[l].astype(jnp.float32), act)
        y = jnp.dot(y.astype(mxu_dtype), w2_buf[slot],
                    preferred_element_type=jnp.float32)
        y = _activation(y + b2_ref[l].astype(jnp.float32), act)
        return h + y

    if n_blocks > 0:
        h = lax.fori_loop(0, n_blocks, block, h, unroll=False)

    o_ref[...] = h.astype(o_ref.dtype)


# --------------------------------------------------------------------------- #
# Wrapper
# --------------------------------------------------------------------------- #
def mlp_forward(x, params, *, n_blocks, act="relu", tile_b=None, mxu_dtype=None,
                stream_weights=None):
    """params = (win, bin, w1, b1, w2, b2); weights already (in, out) layout.

    mxu_dtype: optional MXU input dtype (e.g. jnp.bfloat16 — fast on v5e/v6e/v7x).
               Accumulation, bias add, activation and residual stay f32.
    stream_weights: force (True) / forbid (False) HBM weight streaming; None =
               decide automatically from the generation-aware VMEM budget.
    """
    win, bin_, w1, b1, w2, b2 = params
    B, c_in = x.shape
    c_h = win.shape[1]
    out_dtype = x.dtype

    mm_dtype = jnp.dtype(mxu_dtype) if mxu_dtype is not None else jnp.dtype(x.dtype)
    itemsize = mm_dtype.itemsize
    out_itemsize = jnp.dtype(out_dtype).itemsize

    # Lane/sublane alignment: channel dims -> multiple of 128, batch tile -> 8/16.
    sublane = 16 if mm_dtype == jnp.bfloat16 else 8
    c_in_p = _round_up(c_in, 128)
    c_h_p = _round_up(c_h, 128)

    user_tile = tile_b is not None
    if tile_b is None:
        # Large hidden dims: keep the f32 h/y intermediates (tb*c_h_p*4 each)
        # from competing with resident weights for VMEM.
        tile_b = 256 if c_h_p >= 2048 else 512
    # Cap the tile at ceil(B/2) so the grid has >=2 tiles whenever B allows it
    # (both v7x TensorCores get work, x/out DMAs overlap compute).
    tb = max(sublane, min(_round_up(tile_b, sublane),
                          _round_up(-(-B // 2), sublane)))

    # ---- VMEM budgeting (single-buffered weights, double-buffered x/out,
    #      f32 intermediates, Mosaic scratch headroom) ----
    vmem_cap = _vmem_budget_bytes()
    in_wt_bytes = c_in_p * c_h_p * itemsize
    blk_wt_bytes = 2 * n_blocks * c_h_p * c_h_p * itemsize
    bias_bytes = (1 + 2 * n_blocks) * c_h_p * 4
    io_bytes = 2 * tb * c_in_p * itemsize + 2 * tb * c_h_p * out_itemsize
    interm_bytes = (3 * 4 + itemsize) * tb * c_h_p      # h, y (f32) + mxu-cast copies
    headroom = 8 << 20
    resident_need = (in_wt_bytes + blk_wt_bytes + bias_bytes + io_bytes
                     + interm_bytes + headroom)
    stream = (resident_need > vmem_cap) if stream_weights is None else bool(stream_weights)
    if stream and not user_tile and tb > 256:
        tb = 256  # streamed weights: smaller batch tile keeps us MXU-bound

    B_p = _round_up(B, tb)
    grid = (B_p // tb,)
    n_tiles = grid[0]

    def pad_to(a, shape):
        return jnp.pad(a, [(0, t - s) for s, t in zip(a.shape, shape)])

    x_p = pad_to(x, (B_p, c_in_p)).astype(mm_dtype)
    win_p = pad_to(win, (c_in_p, c_h_p)).astype(mm_dtype)
    w1_p = pad_to(w1, (n_blocks, c_h_p, c_h_p)).astype(mm_dtype)
    w2_p = pad_to(w2, (n_blocks, c_h_p, c_h_p)).astype(mm_dtype)
    # Biases stay f32: bias-add / activation / residual run in f32 on the VPU.
    bin_p = pad_to(bin_, (1, c_h_p)).astype(jnp.float32)
    b1_p = pad_to(b1, (n_blocks, 1, c_h_p)).astype(jnp.float32)
    b2_p = pad_to(b2, (n_blocks, 1, c_h_p)).astype(jnp.float32)

    flops = 2 * B_p * c_h_p * (c_in_p + 2 * n_blocks * c_h_p)
    weight_traffic = in_wt_bytes + bias_bytes + blk_wt_bytes * (n_tiles if stream else 1)
    bytes_accessed = int(B_p * c_in_p * itemsize + weight_traffic
                         + B_p * c_h_p * out_itemsize)

    def const_spec(shape, index_map, single_buffer):
        # Block-invariant inputs (constant index_map): the default pipeline
        # double-buffers them; request a single buffer to halve their VMEM cost.
        if single_buffer and _HAS_BUFFERED:
            return pl.BlockSpec(shape, index_map, pipeline_mode=pl.Buffered(1))
        return pl.BlockSpec(shape, index_map)

    def build_call(single_buffer):
        x_spec = pl.BlockSpec((tb, c_in_p), lambda i: (i, 0))
        out_spec = pl.BlockSpec((tb, c_h_p), lambda i: (i, 0))
        common = dict(
            out_shape=jax.ShapeDtypeStruct((B_p, c_h_p), out_dtype),
            grid=grid,
            out_specs=out_spec,
            compiler_params=pltpu.CompilerParams(
                dimension_semantics=("parallel",),      # megacore split on v7x
                vmem_limit_bytes=int(vmem_cap)),
            cost_estimate=pl.CostEstimate(
                flops=int(flops), transcendentals=0,
                bytes_accessed=bytes_accessed),
        )
        if stream:
            kernel = functools.partial(_mlp_stream_kernel, n_blocks=n_blocks, act=act)
            in_specs = [
                x_spec,
                const_spec((c_in_p, c_h_p), lambda i: (0, 0), single_buffer),
                const_spec((1, c_h_p), lambda i: (0, 0), single_buffer),
                pl.BlockSpec(memory_space=pl.ANY),                     # w1 stays in HBM
                const_spec((n_blocks, 1, c_h_p), lambda i: (0, 0, 0), single_buffer),
                pl.BlockSpec(memory_space=pl.ANY),                     # w2 stays in HBM
                const_spec((n_blocks, 1, c_h_p), lambda i: (0, 0, 0), single_buffer),
            ]
            scratch = [
                pltpu.VMEM((2, c_h_p, c_h_p), mm_dtype),   # w1 ping-pong
                pltpu.VMEM((2, c_h_p, c_h_p), mm_dtype),   # w2 ping-pong
                pltpu.SemaphoreType.DMA((2, 2)),
            ]
            return pl.pallas_call(kernel, in_specs=in_specs,
                                  scratch_shapes=scratch, **common)
        kernel = functools.partial(_mlp_resident_kernel, n_blocks=n_blocks, act=act)
        in_specs = [
            x_spec,
            const_spec((c_in_p, c_h_p), lambda i: (0, 0), single_buffer),
            const_spec((1, c_h_p), lambda i: (0, 0), single_buffer),
            const_spec((n_blocks, c_h_p, c_h_p), lambda i: (0, 0, 0), single_buffer),
            const_spec((n_blocks, 1, c_h_p), lambda i: (0, 0, 0), single_buffer),
            const_spec((n_blocks, c_h_p, c_h_p), lambda i: (0, 0, 0), single_buffer),
            const_spec((n_blocks, 1, c_h_p), lambda i: (0, 0, 0), single_buffer),
        ]
        return pl.pallas_call(kernel, in_specs=in_specs, **common)

    args = (x_p, win_p, bin_p, w1_p, b1_p, w2_p, b2_p)
    try:
        out_p = build_call(single_buffer=True)(*args)
    except Exception:
        # pl.Buffered(1) rejected by this jax/Mosaic version: fall back to the
        # default double-buffered weights (identical numerics, 2x weight VMEM).
        out_p = build_call(single_buffer=False)(*args)

    return out_p[:B, :c_h]


# --------------------------------------------------------------------------- #
# Reference + parameter helpers
# --------------------------------------------------------------------------- #
def init_params(key, c_in, c_h, n_blocks, dtype=jnp.float32):
    """Deterministic synthetic parameters (PyTorch Linear shapes, pre-transposed)."""
    ks = jax.random.split(key, 6)
    scale_in = 1.0 / jnp.sqrt(c_in)
    scale_h = 1.0 / jnp.sqrt(c_h)
    win = jax.random.uniform(ks[0], (c_in, c_h), dtype, -scale_in, scale_in)
    bin_ = jax.random.uniform(ks[1], (1, c_h), dtype, -scale_in, scale_in)
    w1 = jax.random.uniform(ks[2], (n_blocks, c_h, c_h), dtype, -scale_h, scale_h)
    b1 = jax.random.uniform(ks[3], (n_blocks, 1, c_h), dtype, -scale_h, scale_h)
    w2 = jax.random.uniform(ks[4], (n_blocks, c_h, c_h), dtype, -scale_h, scale_h)
    b2 = jax.random.uniform(ks[5], (n_blocks, 1, c_h), dtype, -scale_h, scale_h)
    return win, bin_, w1, b1, w2, b2


def mlp_reference(x, params, *, n_blocks, act="relu"):
    """Pure-JAX reference mirroring the PyTorch forward."""
    win, bin_, w1, b1, w2, b2 = params
    h = x @ win + bin_
    for l in range(n_blocks):
        y = _activation(h @ w1[l] + b1[l], act)
        y = _activation(y @ w2[l] + b2[l], act)
        h = h + y
    return h


if __name__ == "__main__":
    root = jax.random.PRNGKey(0)
    kx1, kp1, kx2, kp2, kx3, kp3 = jax.random.split(root, 6)

    # --- test 1: f32, VMEM-resident weight path ---
    B, c_in, c_h, n_blocks = 8, 16, 32, 2
    x = jax.random.normal(kx1, (B, c_in), jnp.float32)
    params = init_params(kp1, c_in, c_h, n_blocks)
    out = jax.block_until_ready(mlp_forward(x, params, n_blocks=n_blocks, act="relu"))
    ref = mlp_reference(x, params, n_blocks=n_blocks, act="relu")
    assert out.shape == (B, c_h)
    assert jnp.allclose(out, ref, atol=1e-5, rtol=1e-5)

    # --- test 2: ragged shapes + multi-tile batch grid + lrelu (padding path) ---
    B2, c_in2, c_h2, nb2 = 50, 20, 48, 3
    x2 = jax.random.normal(kx2, (B2, c_in2), jnp.float32)
    p2 = init_params(kp2, c_in2, c_h2, nb2)
    out2 = jax.block_until_ready(
        mlp_forward(x2, p2, n_blocks=nb2, act="lrelu", tile_b=16))
    ref2 = mlp_reference(x2, p2, n_blocks=nb2, act="lrelu")
    assert out2.shape == (B2, c_h2)
    assert jnp.allclose(out2, ref2, atol=1e-5, rtol=1e-5)

    # --- test 3: bf16 MXU inputs with f32 accumulation (v5e/v6e/v7x fast path) ---
    out_bf16 = jax.block_until_ready(
        mlp_forward(x, params, n_blocks=n_blocks, act="relu",
                    mxu_dtype=jnp.bfloat16))
    assert out_bf16.shape == (B, c_h)
    assert float(jnp.max(jnp.abs(out_bf16 - ref))) < 0.25  # bf16 quantizes x too

    # --- test 4: forced HBM weight streaming (v7x fallback for large c_h) ---
    B3, c_in3, c_h3, nb3 = 40, 16, 32, 2
    x3 = jax.random.normal(kx3, (B3, c_in3), jnp.float32)
    p3 = init_params(kp3, c_in3, c_h3, nb3)
    out3 = jax.block_until_ready(
        mlp_forward(x3, p3, n_blocks=nb3, act="relu", tile_b=16,
                    stream_weights=True))
    ref3 = mlp_reference(x3, p3, n_blocks=nb3, act="relu")
    assert out3.shape == (B3, c_h3)
    assert jnp.allclose(out3, ref3, atol=1e-5, rtol=1e-5)

    print("KERNEL_OK")
</pallas_src>

<mosaic_0001>
module attributes {stable_mosaic.version = 11 : i64} {
  func.func @_mlp_resident_kernel(%arg0: i32, %arg1: memref<8x128xf32, #tpu.memory_space<vmem>>, %arg2: memref<128x128xf32, #tpu.memory_space<vmem>>, %arg3: memref<1x128xf32, #tpu.memory_space<vmem>>, %arg4: memref<2x128x128xf32, #tpu.memory_space<vmem>>, %arg5: memref<2x1x128xf32, #tpu.memory_space<vmem>>, %arg6: memref<2x128x128xf32, #tpu.memory_space<vmem>>, %arg7: memref<2x1x128xf32, #tpu.memory_space<vmem>>, %arg8: memref<8x128xf32, #tpu.memory_space<vmem>>) attributes {dimension_semantics = [#tpu.dimension_semantics<parallel>], iteration_bounds = array<i64: 1>, scalar_prefetch = 0 : i64, scratch_operands = 0 : i64, tpu.core_type = #tpu.core_type<tc>, window_params = [{transform_indices = @transform_0, window_bounds = array<i64: 8, 128>}, {pipeline_mode = #tpu.pipeline_mode<synchronous>, transform_indices = @transform_1, window_bounds = array<i64: 128, 128>}, {pipeline_mode = #tpu.pipeline_mode<synchronous>, transform_indices = @transform_2, window_bounds = array<i64: 1, 128>}, {pipeline_mode = #tpu.pipeline_mode<synchronous>, transform_indices = @transform_3, window_bounds = array<i64: 2, 128, 128>}, {pipeline_mode = #tpu.pipeline_mode<synchronous>, transform_indices = @transform_4, window_bounds = array<i64: 2, 1, 128>}, {pipeline_mode = #tpu.pipeline_mode<synchronous>, transform_indices = @transform_5, window_bounds = array<i64: 2, 128, 128>}, {pipeline_mode = #tpu.pipeline_mode<synchronous>, transform_indices = @transform_6, window_bounds = array<i64: 2, 1, 128>}, {transform_indices = @transform_7, window_bounds = array<i64: 8, 128>}]} {
    %c0 = arith.constant 0 : index
    %c0_0 = arith.constant 0 : index
    %0 = vector.load %arg1[%c0, %c0_0] : memref<8x128xf32, #tpu.memory_space<vmem>>, vector<8x128xf32>
    %c0_1 = arith.constant 0 : index
    %c0_2 = arith.constant 0 : index
    %1 = vector.load %arg2[%c0_1, %c0_2] : memref<128x128xf32, #tpu.memory_space<vmem>>, vector<128x128xf32>
    %cst = arith.constant dense<0.000000e+00> : vector<8x128xf32>
    %2 = tpu.matmul %0, %1, %cst {dimension_numbers = #tpu.dot_dimension_numbers<[1], [0], [0], [1], [0, 0, 1, 1], [], []>} : vector<8x128xf32>, vector<128x128xf32>, vector<8x128xf32> -> vector<8x128xf32>
    %c0_3 = arith.constant 0 : index
    %c0_4 = arith.constant 0 : index
    %3 = vector.load %arg3[%c0_3, %c0_4] : memref<1x128xf32, #tpu.memory_space<vmem>>, vector<1x128xf32>
    %4 = vector.broadcast %3 : vector<1x128xf32> to vector<8x128xf32>
    %5 = arith.addf %2, %4 : vector<8x128xf32>
    %c0_i32 = arith.constant 0 : i32
    %6 = arith.index_cast %c0_i32 : i32 to index
    %c0_5 = arith.constant 0 : index
    %c0_6 = arith.constant 0 : index
    %7 = vector.load %arg4[%6, %c0_5, %c0_6] : memref<2x128x128xf32, #tpu.memory_space<vmem>>, vector<1x128x128xf32>
    %8 = vector.shape_cast %7 : vector<1x128x128xf32> to vector<128x128xf32>
    %cst_7 = arith.constant dense<0.000000e+00> : vector<8x128xf32>
    %9 = tpu.matmul %5, %8, %cst_7 {dimension_numbers = #tpu.dot_dimension_numbers<[1], [0], [0], [1], [0, 0, 1, 1], [], []>} : vector<8x128xf32>, vector<128x128xf32>, vector<8x128xf32> -> vector<8x128xf32>
    %10 = arith.index_cast %c0_i32 : i32 to index
    %c0_8 = arith.constant 0 : index
    %c0_9 = arith.constant 0 : index
    %11 = vector.load %arg5[%10, %c0_8, %c0_9] : memref<2x1x128xf32, #tpu.memory_space<vmem>>, vector<1x1x128xf32>
    %12 = vector.shape_cast %11 : vector<1x1x128xf32> to vector<1x128xf32>
    %13 = vector.broadcast %12 : vector<1x128xf32> to vector<8x128xf32>
    %14 = arith.addf %9, %13 : vector<8x128xf32>
    %cst_10 = arith.constant 0.000000e+00 : f32
    %15 = vector.broadcast %cst_10 : f32 to vector<8x128xf32>
    %16 = arith.maximumf %14, %15 : vector<8x128xf32>
    %17 = arith.index_cast %c0_i32 : i32 to index
    %c0_11 = arith.constant 0 : index
    %c0_12 = arith.constant 0 : index
    %18 = vector.load %arg6[%17, %c0_11, %c0_12] : memref<2x128x128xf32, #tpu.memory_space<vmem>>, vector<1x128x128xf32>
    %19 = vector.shape_cast %18 : vector<1x128x128xf32> to vector<128x128xf32>
    %cst_13 = arith.constant dense<0.000000e+00> : vector<8x128xf32>
    %20 = tpu.matmul %16, %19, %cst_13 {dimension_numbers = #tpu.dot_dimension_numbers<[1], [0], [0], [1], [0, 0, 1, 1], [], []>} : vector<8x128xf32>, vector<128x128xf32>, vector<8x128xf32> -> vector<8x128xf32>
    %21 = arith.index_cast %c0_i32 : i32 to index
    %c0_14 = arith.constant 0 : index
    %c0_15 = arith.constant 0 : index
    %22 = vector.load %arg7[%21, %c0_14, %c0_15] : memref<2x1x128xf32, #tpu.memory_space<vmem>>, vector<1x1x128xf32>
    %23 = vector.shape_cast %22 : vector<1x1x128xf32> to vector<1x128xf32>
    %24 = vector.broadcast %23 : vector<1x128xf32> to vector<8x128xf32>
    %25 = arith.addf %20, %24 : vector<8x128xf32>
    %cst_16 = arith.constant 0.000000e+00 : f32
    %26 = vector.broadcast %cst_16 : f32 to vector<8x128xf32>
    %27 = arith.maximumf %25, %26 : vector<8x128xf32>
    %28 = arith.addf %5, %27 : vector<8x128xf32>
    %c1_i32 = arith.constant 1 : i32
    %29 = arith.index_cast %c1_i32 : i32 to index
    %c0_17 = arith.constant 0 : index
    %c0_18 = arith.constant 0 : index
    %30 = vector.load %arg4[%29, %c0_17, %c0_18] : memref<2x128x128xf32, #tpu.memory_space<vmem>>, vector<1x128x128xf32>
    %31 = vector.shape_cast %30 : vector<1x128x128xf32> to vector<128x128xf32>
    %cst_19 = arith.constant dense<0.000000e+00> : vector<8x128xf32>
    %32 = tpu.matmul %28, %31, %cst_19 {dimension_numbers = #tpu.dot_dimension_numbers<[1], [0], [0], [1], [0, 0, 1, 1], [], []>} : vector<8x128xf32>, vector<128x128xf32>, vector<8x128xf32> -> vector<8x128xf32>
    %33 = arith.index_cast %c1_i32 : i32 to index
    %c0_20 = arith.constant 0 : index
    %c0_21 = arith.constant 0 : index
    %34 = vector.load %arg5[%33, %c0_20, %c0_21] : memref<2x1x128xf32, #tpu.memory_space<vmem>>, vector<1x1x128xf32>
    %35 = vector.shape_cast %34 : vector<1x1x128xf32> to vector<1x128xf32>
    %36 = vector.broadcast %35 : vector<1x128xf32> to vector<8x128xf32>
    %37 = arith.addf %32, %36 : vector<8x128xf32>
    %cst_22 = arith.constant 0.000000e+00 : f32
    %38 = vector.broadcast %cst_22 : f32 to vector<8x128xf32>
    %39 = arith.maximumf %37, %38 : vector<8x128xf32>
    %40 = arith.index_cast %c1_i32 : i32 to index
    %c0_23 = arith.constant 0 : index
    %c0_24 = arith.constant 0 : index
    %41 = vector.load %arg6[%40, %c0_23, %c0_24] : memref<2x128x128xf32, #tpu.memory_space<vmem>>, vector<1x128x128xf32>
    %42 = vector.shape_cast %41 : vector<1x128x128xf32> to vector<128x128xf32>
    %cst_25 = arith.constant dense<0.000000e+00> : vector<8x128xf32>
    %43 = tpu.matmul %39, %42, %cst_25 {dimension_numbers = #tpu.dot_dimension_numbers<[1], [0], [0], [1], [0, 0, 1, 1], [], []>} : vector<8x128xf32>, vector<128x128xf32>, vector<8x128xf32> -> vector<8x128xf32>
    %44 = arith.index_cast %c1_i32 : i32 to index
    %c0_26 = arith.constant 0 : index
    %c0_27 = arith.constant 0 : index
    %45 = vector.load %arg7[%44, %c0_26, %c0_27] : memref<2x1x128xf32, #tpu.memory_space<vmem>>, vector<1x1x128xf32>
    %46 = vector.shape_cast %45 : vector<1x1x128xf32> to vector<1x128xf32>
    %47 = vector.broadcast %46 : vector<1x128xf32> to vector<8x128xf32>
    %48 = arith.addf %43, %47 : vector<8x128xf32>
    %cst_28 = arith.constant 0.000000e+00 : f32
    %49 = vector.broadcast %cst_28 : f32 to vector<8x128xf32>
    %50 = arith.maximumf %48, %49 : vector<8x128xf32>
    %51 = arith.addf %28, %50 : vector<8x128xf32>
    %c2_i32 = arith.constant 2 : i32
    %c0_29 = arith.constant 0 : index
    %c0_30 = arith.constant 0 : index
    %52 = vector.load %arg8[%c0_29, %c0_30] : memref<8x128xf32, #tpu.memory_space<vmem>>, vector<8x128xf32>
    tpu.vector_store %arg8[%c0_29, %c0_30], %51 {strides = array<i32>} : memref<8x128xf32, #tpu.memory_space<vmem>>, vector<8x128xf32>,
    return
  }
  func.func @transform_0(%arg0: i32) -> (i32, i32) {
    %c0_i32 = arith.constant 0 : i32
    %c0_i32_0 = arith.constant 0 : i32
    return %arg0, %c0_i32 : i32, i32
  }
  func.func @transform_1(%arg0: i32) -> (i32, i32) {
    %c0_i32 = arith.constant 0 : i32
    %c0_i32_0 = arith.constant 0 : i32
    %c0_i32_1 = arith.constant 0 : i32
    return %c0_i32, %c0_i32_0 : i32, i32
  }
  func.func @transform_2(%arg0: i32) -> (i32, i32) {
    %c0_i32 = arith.constant 0 : i32
    %c0_i32_0 = arith.constant 0 : i32
    %c0_i32_1 = arith.constant 0 : i32
    return %c0_i32, %c0_i32_0 : i32, i32
  }
  func.func @transform_3(%arg0: i32) -> (i32, i32, i32) {
    %c0_i32 = arith.constant 0 : i32
    %c0_i32_0 = arith.constant 0 : i32
    %c0_i32_1 = arith.constant 0 : i32
    %c0_i32_2 = arith.constant 0 : i32
    return %c0_i32, %c0_i32_0, %c0_i32_1 : i32, i32, i32
  }
  func.func @transform_4(%arg0: i32) -> (i32, i32, i32) {
    %c0_i32 = arith.constant 0 : i32
    %c0_i32_0 = arith.constant 0 : i32
    %c0_i32_1 = arith.constant 0 : i32
    %c0_i32_2 = arith.constant 0 : i32
    return %c0_i32, %c0_i32_0, %c0_i32_1 : i32, i32, i32
  }
  func.func @transform_5(%arg0: i32) -> (i32, i32, i32) {
    %c0_i32 = arith.constant 0 : i32
    %c0_i32_0 = arith.constant 0 : i32
    %c0_i32_1 = arith.constant 0 : i32
    %c0_i32_2 = arith.constant 0 : i32
    return %c0_i32, %c0_i32_0, %c0_i32_1 : i32, i32, i32
  }
  func.func @transform_6(%arg0: i32) -> (i32, i32, i32) {
    %c0_i32 = arith.constant 0 : i32
    %c0_i32_0 = arith.constant 0 : i32
    %c0_i32_1 = arith.constant 0 : i32
    %c0_i32_2 = arith.constant 0 : i32
    return %c0_i32, %c0_i32_0, %c0_i32_1 : i32, i32, i32
  }
  func.func @transform_7(%arg0: i32) -> (i32, i32) {
    %c0_i32 = arith.constant 0 : i32
    %c0_i32_0 = arith.constant 0 : i32
    return %arg0, %c0_i32 : i32, i32
  }
}

module attributes {stable_mosaic.version = 11 : i64} {
  func.func @_mlp_resident_kernel(%arg0: i32, %arg1: memref<8x128xf32, #tpu.memory_space<vmem>>, %arg2: memref<128x128xf32, #tpu.memory_space<vmem>>, %arg3: memref<1x128xf32, #tpu.memory_space<vmem>>, %arg4: memref<2x128x128xf32, #tpu.memory_space<vmem>>, %arg5: memref<2x1x128xf32, #tpu.memory_space<vmem>>, %arg6: memref<2x128x128xf32, #tpu.memory_space<vmem>>, %arg7: memref<2x1x128xf32, #tpu.memory_space<vmem>>, %arg8: memref<8x128xf32, #tpu.memory_space<vmem>>) attributes {dimension_semantics = [#tpu.dimension_semantics<parallel>], iteration_bounds = array<i64: 1>, scalar_prefetch = 0 : i64, scratch_operands = 0 : i64, tpu.core_type = #tpu.core_type<tc>, window_params = [{transform_indices = @transform_0, window_bounds = array<i64: 8, 128>}, {pipeline_mode = #tpu.pipeline_mode<synchronous>, transform_indices = @transform_1, window_bounds = array<i64: 128, 128>}, {pipeline_mode = #tpu.pipeline_mode<synchronous>, transform_indices = @transform_2, window_bounds = array<i64: 1, 128>}, {pipeline_mode = #tpu.pipeline_mode<synchronous>, transform_indices = @transform_3, window_bounds = array<i64: 2, 128, 128>}, {pipeline_mode = #tpu.pipeline_mode<synchronous>, transform_indices = @transform_4, window_bounds = array<i64: 2, 1, 128>}, {pipeline_mode = #tpu.pipeline_mode<synchronous>, transform_indices = @transform_5, window_bounds = array<i64: 2, 128, 128>}, {pipeline_mode = #tpu.pipeline_mode<synchronous>, transform_indices = @transform_6, window_bounds = array<i64: 2, 1, 128>}, {transform_indices = @transform_7, window_bounds = array<i64: 8, 128>}]} {
    %c0 = arith.constant 0 : index
    %c0_0 = arith.constant 0 : index
    %0 = vector.load %arg1[%c0, %c0_0] : memref<8x128xf32, #tpu.memory_space<vmem>>, vector<8x128xf32>
    %c0_1 = arith.constant 0 : index
    %c0_2 = arith.constant 0 : index
    %1 = vector.load %arg2[%c0_1, %c0_2] : memref<128x128xf32, #tpu.memory_space<vmem>>, vector<128x128xf32>
    %cst = arith.constant dense<0.000000e+00> : vector<8x128xf32>
    %2 = tpu.matmul %0, %1, %cst {dimension_numbers = #tpu.dot_dimension_numbers<[1], [0], [0], [1], [0, 0, 1, 1], [], []>} : vector<8x128xf32>, vector<128x128xf32>, vector<8x128xf32> -> vector<8x128xf32>
    %c0_3 = arith.constant 0 : index
    %c0_4 = arith.constant 0 : index
    %3 = vector.load %arg3[%c0_3, %c0_4] : memref<1x128xf32, #tpu.memory_space<vmem>>, vector<1x128xf32>
    %4 = vector.broadcast %3 : vector<1x128xf32> to vector<8x128xf32>
    %5 = arith.addf %2, %4 : vector<8x128xf32>
    %c0_i32 = arith.constant 0 : i32
    %6 = arith.index_cast %c0_i32 : i32 to index
    %c0_5 = arith.constant 0 : index
    %c0_6 = arith.constant 0 : index
    %7 = vector.load %arg4[%6, %c0_5, %c0_6] : memref<2x128x128xf32, #tpu.memory_space<vmem>>, vector<1x128x128xf32>
    %8 = vector.shape_cast %7 : vector<1x128x128xf32> to vector<128x128xf32>
    %cst_7 = arith.constant dense<0.000000e+00> : vector<8x128xf32>
    %9 = tpu.matmul %5, %8, %cst_7 {dimension_numbers = #tpu.dot_dimension_numbers<[1], [0], [0], [1], [0, 0, 1, 1], [], []>} : vector<8x128xf32>, vector<128x128xf32>, vector<8x128xf32> -> vector<8x128xf32>
    %10 = arith.index_cast %c0_i32 : i32 to index
    %c0_8 = arith.constant 0 : index
    %c0_9 = arith.constant 0 : index
    %11 = vector.load %arg5[%10, %c0_8, %c0_9] : memref<2x1x128xf32, #tpu.memory_space<vmem>>, vector<1x1x128xf32>
    %12 = vector.shape_cast %11 : vector<1x1x128xf32> to vector<1x128xf32>
    %13 = vector.broadcast %12 : vector<1x128xf32> to vector<8x128xf32>
    %14 = arith.addf %9, %13 : vector<8x128xf32>
    %cst_10 = arith.constant 0.000000e+00 : f32
    %15 = vector.broadcast %cst_10 : f32 to vector<8x128xf32>
    %16 = arith.maximumf %14, %15 : vector<8x128xf32>
    %17 = arith.index_cast %c0_i32 : i32 to index
    %c0_11 = arith.constant 0 : index
    %c0_12 = arith.constant 0 : index
    %18 = vector.load %arg6[%17, %c0_11, %c0_12] : memref<2x128x128xf32, #tpu.memory_space<vmem>>, vector<1x128x128xf32>
    %19 = vector.shape_cast %18 : vector<1x128x128xf32> to vector<128x128xf32>
    %cst_13 = arith.constant dense<0.000000e+00> : vector<8x128xf32>
    %20 = tpu.matmul %16, %19, %cst_13 {dimension_numbers = #tpu.dot_dimension_numbers<[1], [0], [0], [1], [0, 0, 1, 1], [], []>} : vector<8x128xf32>, vector<128x128xf32>, vector<8x128xf32> -> vector<8x128xf32>
    %21 = arith.index_cast %c0_i32 : i32 to index
    %c0_14 = arith.constant 0 : index
    %c0_15 = arith.constant 0 : index
    %22 = vector.load %arg7[%21, %c0_14, %c0_15] : memref<2x1x128xf32, #tpu.memory_space<vmem>>, vector<1x1x128xf32>
    %23 = vector.shape_cast %22 : vector<1x1x128xf32> to vector<1x128xf32>
    %24 = vector.broadcast %23 : vector<1x128xf32> to vector<8x128xf32>
    %25 = arith.addf %20, %24 : vector<8x128xf32>
    %cst_16 = arith.constant 0.000000e+00 : f32
    %26 = vector.broadcast %cst_16 : f32 to vector<8x128xf32>
    %27 = arith.maximumf %25, %26 : vector<8x128xf32>
    %28 = arith.addf %5, %27 : vector<8x128xf32>
    %c1_i32 = arith.constant 1 : i32
    %29 = arith.index_cast %c1_i32 : i32 to index
    %c0_17 = arith.constant 0 : index
    %c0_18 = arith.constant 0 : index
    %30 = vector.load %arg4[%29, %c0_17, %c0_18] : memref<2x128x128xf32, #tpu.memory_space<vmem>>, vector<1x128x128xf32>
    %31 = vector.shape_cast %30 : vector<1x128x128xf32> to vector<128x128xf32>
    %cst_19 = arith.constant dense<0.000000e+00> : vector<8x128xf32>
    %32 = tpu.matmul %28, %31, %cst_19 {dimension_numbers = #tpu.dot_dimension_numbers<[1], [0], [0], [1], [0, 0, 1, 1], [], []>} : vector<8x128xf32>, vector<128x128xf32>, vector<8x128xf32> -> vector<8x128xf32>
    %33 = arith.index_cast %c1_i32 : i32 to index
    %c0_20 = arith.constant 0 : index
    %c0_21 = arith.constant 0 : index
    %34 = vector.load %arg5[%33, %c0_20, %c0_21] : memref<2x1x128xf32, #tpu.memory_space<vmem>>, vector<1x1x128xf32>
    %35 = vector.shape_cast %34 : vector<1x1x128xf32> to vector<1x128xf32>
    %36 = vector.broadcast %35 : vector<1x128xf32> to vector<8x128xf32>
    %37 = arith.addf %32, %36 : vector<8x128xf32>
    %cst_22 = arith.constant 0.000000e+00 : f32
    %38 = vector.broadcast %cst_22 : f32 to vector<8x128xf32>
    %39 = arith.maximumf %37, %38 : vector<8x128xf32>
    %40 = arith.index_cast %c1_i32 : i32 to index
    %c0_23 = arith.constant 0 : index
    %c0_24 = arith.constant 0 : index
    %41 = vector.load %arg6[%40, %c0_23, %c0_24] : memref<2x128x128xf32, #tpu.memory_space<vmem>>, vector<1x128x128xf32>
    %42 = vector.shape_cast %41 : vector<1x128x128xf32> to vector<128x128xf32>
    %cst_25 = arith.constant dense<0.000000e+00> : vector<8x128xf32>
    %43 = tpu.matmul %39, %42, %cst_25 {dimension_numbers = #tpu.dot_dimension_numbers<[1], [0], [0], [1], [0, 0, 1, 1], [], []>} : vector<8x128xf32>, vector<128x128xf32>, vector<8x128xf32> -> vector<8x128xf32>
    %44 = arith.index_cast %c1_i32 : i32 to index
    %c0_26 = arith.constant 0 : index
    %c0_27 = arith.constant 0 : index
    %45 = vector.load %arg7[%44, %c0_26, %c0_27] : memref<2x1x128xf32, #tpu.memory_space<vmem>>, vector<1x1x128xf32>
    %46 = vector.shape_cast %45 : vector<1x1x128xf32> to vector<1x128xf32>
    %47 = vector.broadcast %46 : vector<1x128xf32> to vector<8x128xf32>
    %48 = arith.addf %43, %47 : vector<8x128xf32>
    %cst_28 = arith.constant 0.000000e+00 : f32
    %49 = vector.broadcast %cst_28 : f32 to vector<8x128xf32>
    %50 = arith.maximumf %48, %49 : vector<8x128xf32>
    %51 = arith.addf %28, %50 : vector<8x128xf32>
    %c2_i32 = arith.constant 2 : i32
    %c0_29 = arith.constant 0 : index
    %c0_30 = arith.constant 0 : index
    %52 = vector.load %arg8[%c0_29, %c0_30] : memref<8x128xf32, #tpu.memory_space<vmem>>, vector<8x128xf32>
    tpu.vector_store %arg8[%c0_29, %c0_30], %51 {strides = array<i32>} : memref<8x128xf32, #tpu.memory_space<vmem>>, vector<8x128xf32>,
    return
  }
  func.func @transform_0(%arg0: i32) -> (i32, i32) {
    %c0_i32 = arith.constant 0 : i32
    %c0_i32_0 = arith.constant 0 : i32
    return %arg0, %c0_i32 : i32, i32
  }
  func.func @transform_1(%arg0: i32) -> (i32, i32) {
    %c0_i32 = arith.constant 0 : i32
    %c0_i32_0 = arith.constant 0 : i32
    %c0_i32_1 = arith.constant 0 : i32
    return %c0_i32, %c0_i32_0 : i32, i32
  }
  func.func @transform_2(%arg0: i32) -> (i32, i32) {
    %c0_i32 = arith.constant 0 : i32
    %c0_i32_0 = arith.constant 0 : i32
    %c0_i32_1 = arith.constant 0 : i32
    return %c0_i32, %c0_i32_0 : i32, i32
  }
  func.func @transform_3(%arg0: i32) -> (i32, i32, i32) {
    %c0_i32 = arith.constant 0 : i32
    %c0_i32_0 = arith.constant 0 : i32
    %c0_i32_1 = arith.constant 0 : i32
    %c0_i32_2 = arith.constant 0 : i32
    return %c0_i32, %c0_i32_0, %c0_i32_1 : i32, i32, i32
  }
  func.func @transform_4(%arg0: i32) -> (i32, i32, i32) {
    %c0_i32 = arith.constant 0 : i32
    %c0_i32_0 = arith.constant 0 : i32
    %c0_i32_1 = arith.constant 0 : i32
    %c0_i32_2 = arith.constant 0 : i32
    return %c0_i32, %c0_i32_0, %c0_i32_1 : i32, i32, i32
  }
  func.func @transform_5(%arg0: i32) -> (i32, i32, i32) {
    %c0_i32 = arith.constant 0 : i32
    %c0_i32_0 = arith.constant 0 : i32
    %c0_i32_1 = arith.constant 0 : i32
    %c0_i32_2 = arith.constant 0 : i32
    return %c0_i32, %c0_i32_0, %c0_i32_1 : i32, i32, i32
  }
  func.func @transform_6(%arg0: i32) -> (i32, i32, i32) {
    %c0_i32 = arith.constant 0 : i32
    %c0_i32_0 = arith.constant 0 : i32
    %c0_i32_1 = arith.constant 0 : i32
    %c0_i32_2 = arith.constant 0 : i32
    return %c0_i32, %c0_i32_0, %c0_i32_1 : i32, i32, i32
  }
  func.func @transform_7(%arg0: i32) -> (i32, i32) {
    %c0_i32 = arith.constant 0 : i32
    %c0_i32_0 = arith.constant 0 : i32
    return %arg0, %c0_i32 : i32, i32
  }
}

</mosaic_0001>

<llo_original>
// kernel: tpu_custom_call.1
$region0: #{tpu_custom_call.1}
  #allocation0 [shape = 'u32[]', space=smem, size = 0x4, offset = 0x4, fixed_abs, tag = 'smem constant byte address 0x4 - core index']
  #allocation1 [shape = 'u32[144,128]{1,0:T(1,128)}', space=vmem, size = 0x12000, scoped, tag = 'internal scratch']
  %s0 = inlined_call_operand.hbm [shape: f32[8,128], index: 0, kind: input, shape index: {}]
  %s1 = inlined_call_operand.hbm [shape: f32[128,128], index: 1, kind: input, shape index: {}]
  %s2 = inlined_call_operand.vmem [shape: f32[1,128], index: 2, kind: input, shape index: {}]
  %s3 = inlined_call_operand.hbm [shape: f32[2,128,128], index: 3, kind: input, shape index: {}]
  %s4 = inlined_call_operand.vmem [shape: f32[2,1,128], index: 4, kind: input, shape index: {}]
  %s5 = inlined_call_operand.hbm [shape: f32[2,128,128], index: 5, kind: input, shape index: {}]
  %s6 = inlined_call_operand.vmem [shape: f32[2,1,128], index: 6, kind: input, shape index: {}]
  %s7 = inlined_call_operand.hbm [shape: f32[8,128], index: 7, kind: output, shape index: {}]
  %s8 = sld [smem:[#allocation0]]
  $region54: #{tpu_custom_call.1} parent=0
    _
  %s10 = ssub.s32 1, %s8
  %s11 = scalar_select 0, %s10, %s8
  $region1: #{tpu_custom_call.1} parent=0
    #allocation2 [shape = 'u8[4096]{0}', space=vmem, size = 0x1000, scoped, tag = 'input window, operand 0, single buffered']
    #allocation3 [shape = 's32[1]{0}', space=sflag, size = 0x4, scoped, tag = 'scoped memory for tpu_custom_call.1']
    #allocation4 [shape = 's32[1]{0}', space=sflag, size = 0x4, scoped, tag = 'scoped memory for tpu_custom_call.1']
    #allocation5 [shape = 'u8[65536]{0}', space=vmem, size = 0x10000, scoped, tag = 'input window, operand 1, single buffered']
    #allocation6 [shape = 's32[1]{0}', space=sflag, size = 0x4, scoped, tag = 'scoped memory for tpu_custom_call.1']
    #allocation7 [shape = 'u8[131072]{0}', space=vmem, size = 0x20000, scoped, tag = 'input window, operand 3, single buffered']
    #allocation8 [shape = 'u8[131072]{0}', space=vmem, size = 0x20000, scoped, tag = 'input window, operand 5, single buffered']
    #allocation9 [shape = 's32[1]{0}', space=sflag, size = 0x4, scoped, tag = 'scoped memory for tpu_custom_call.1']
    #allocation10 [shape = 'u8[4096]{0}', space=vmem, size = 0x1000, scoped, tag = 'output window, operand 0, single buffered']
    %12 = vsyncpa [#allocation3], 0
    %13 = vsyncpa [#allocation6], 0
    %14 = vsyncpa [#allocation9], 0
    %15 = vsyncpa [#allocation4], 0
    // Predicated region
    $region2: #{tpu_custom_call.1} parent=1 // pred_check
      _
    $region3: #{tpu_custom_call.1} parent=1 // pred_check_branch
      %17 = sbr.rel (0) target = $region5
    $region4: #{tpu_custom_call.1} parent=1 // pred_region
      %s19 = ssub.s32 128, 128
      %20 = vsyncadd [#allocation3], %s19
      %s22 = sshll.u32 [#allocation2], 4
      %s23 = int_to_ptr.vmem [resolvable:$true] %s22
      %25 = dma.hbm_to_vmem [thread:$0]  %s0, 128, %s23, [#allocation3]
    $region5: #{tpu_custom_call.1} parent=1 // pred_fallthru
      _
    // Predicated region
    $region6: #{tpu_custom_call.1} parent=1 // pred_check
      _
    $region7: #{tpu_custom_call.1} parent=1 // pred_check_branch
      %27 = sbr.rel (0) target = $region9
    $region8: #{tpu_custom_call.1} parent=1 // pred_region
      %s29 = ssub.s32 2048, 2048
      %30 = vsyncadd [#allocation6], %s29
      %s31 = sshll.u32 [#allocation5], 4
      %s32 = int_to_ptr.vmem [resolvable:$true] %s31
      %37 = dma.hbm_to_vmem [thread:$0]  %s1, 2048, %s32, [#allocation6], 128, 128, 8
    $region9: #{tpu_custom_call.1} parent=1 // pred_fallthru
      _
    // Predicated region
    $region10: #{tpu_custom_call.1} parent=1 // pred_check
      _
    $region11: #{tpu_custom_call.1} parent=1 // pred_check_branch
      %39 = sbr.rel (0) target = $region13
    $region12: #{tpu_custom_call.1} parent=1 // pred_region
      _
    $region13: #{tpu_custom_call.1} parent=1 // pred_fallthru
      _
    // Predicated region
    $region14: #{tpu_custom_call.1} parent=1 // pred_check
      _
    $region15: #{tpu_custom_call.1} parent=1 // pred_check_branch
      %41 = sbr.rel (0) target = $region17
    $region16: #{tpu_custom_call.1} parent=1 // pred_region
      %s43 = ssub.s32 4096, 4096
      %44 = vsyncadd [#allocation6], %s43
      %s45 = sshll.u32 [#allocation7], 4
      %s46 = int_to_ptr.vmem [resolvable:$true] %s45
      %51 = dma.hbm_to_vmem [thread:$0]  %s3, 4096, %s46, [#allocation6], 128, 128, 8
    $region17: #{tpu_custom_call.1} parent=1 // pred_fallthru
      _
    // Predicated region
    $region18: #{tpu_custom_call.1} parent=1 // pred_check
      _
    $region19: #{tpu_custom_call.1} parent=1 // pred_check_branch
      %53 = sbr.rel (0) target = $region21
    $region20: #{tpu_custom_call.1} parent=1 // pred_region
      _
    $region21: #{tpu_custom_call.1} parent=1 // pred_fallthru
      _
    // Predicated region
    $region22: #{tpu_custom_call.1} parent=1 // pred_check
      _
    $region23: #{tpu_custom_call.1} parent=1 // pred_check_branch
      %55 = sbr.rel (0) target = $region25
    $region24: #{tpu_custom_call.1} parent=1 // pred_region
      %s57 = ssub.s32 4096, 4096
      %58 = vsyncadd [#allocation9], %s57
      %s59 = sshll.u32 [#allocation8], 4
      %s60 = int_to_ptr.vmem [resolvable:$true] %s59
      %65 = dma.hbm_to_vmem [thread:$0]  %s5, 4096, %s60, [#allocation9], 128, 128, 8
    $region25: #{tpu_custom_call.1} parent=1 // pred_fallthru
      _
    // Predicated region
    $region26: #{tpu_custom_call.1} parent=1 // pred_check
      _
    $region27: #{tpu_custom_call.1} parent=1 // pred_check_branch
      %67 = sbr.rel (0) target = $region29
    $region28: #{tpu_custom_call.1} parent=1 // pred_region
      _
    $region29: #{tpu_custom_call.1} parent=1 // pred_fallthru
      _
    // Predicated region
    $region30: #{tpu_custom_call.1} parent=1 // pred_check
      _
    $region31: #{tpu_custom_call.1} parent=1 // pred_check_branch
      %69 = sbr.rel (0) target = $region33
    $region32: #{tpu_custom_call.1} parent=1 // pred_region
      %70 = dma.done [#allocation3], 128
    $region33: #{tpu_custom_call.1} parent=1 // pred_fallthru
      _
    // Predicated region
    $region34: #{tpu_custom_call.1} parent=1 // pred_check
      _
    $region35: #{tpu_custom_call.1} parent=1 // pred_check_branch
      %72 = sbr.rel (0) target = $region37
    $region36: #{tpu_custom_call.1} parent=1 // pred_region
      %73 = dma.done [#allocation6], 2048
    $region37: #{tpu_custom_call.1} parent=1 // pred_fallthru
      _
    // Predicated region
    $region38: #{tpu_custom_call.1} parent=1 // pred_check
      _
    $region39: #{tpu_custom_call.1} parent=1 // pred_check_branch
      %75 = sbr.rel (0) target = $region41
    $region40: #{tpu_custom_call.1} parent=1 // pred_region
      %76 = dma.done [#allocation6], 4096
    $region41: #{tpu_custom_call.1} parent=1 // pred_fallthru
      _
    // Predicated region
    $region42: #{tpu_custom_call.1} parent=1 // pred_check
      _
    $region43: #{tpu_custom_call.1} parent=1 // pred_check_branch
      %78 = sbr.rel (0) target = $region45
    $region44: #{tpu_custom_call.1} parent=1 // pred_region
      %79 = dma.done [#allocation9], 4096
    $region45: #{tpu_custom_call.1} parent=1 // pred_fallthru
      _
    %v80 = vld [vmem:[#allocation2] sm:$0xff]
    %v81 = vld [vmem:[#allocation5] sm:$0xff]
    %v82 = vld [vmem:[#allocation5 + $0x8] sm:$0xff]
    %v83 = vld [vmem:[#allocation5 + $0x10] sm:$0xff]
    %v84 = vld [vmem:[#allocation5 + $0x18] sm:$0xff]
    %v85 = vld [vmem:[#allocation5 + $0x20] sm:$0xff]
    %v86 = vld [vmem:[#allocation5 + $0x28] sm:$0xff]
    %v87 = vld [vmem:[#allocation5 + $0x30] sm:$0xff]
    %v88 = vld [vmem:[#allocation5 + $0x38] sm:$0xff]
    %v89 = vld [vmem:[#allocation5 + $0x40] sm:$0xff]
    %v90 = vld [vmem:[#allocation5 + $0x48] sm:$0xff]
    %v91 = vld [vmem:[#allocation5 + $0x50] sm:$0xff]
    %v92 = vld [vmem:[#allocation5 + $0x58] sm:$0xff]
    %v93 = vld [vmem:[#allocation5 + $0x60] sm:$0xff]
    %v94 = vld [vmem:[#allocation5 + $0x68] sm:$0xff]
    %v95 = vld [vmem:[#allocation5 + $0x70] sm:$0xff]
    %v96 = vld [vmem:[#allocation5 + $0x78] sm:$0xff]
    %v97 = vld [vmem:[%s2] sm:$0x1]
    %v99 = vlaneseq
    %v100 = vshrl.u32 %v99, 7
    %v101 = vsub.s32 0, %v100
    %v102 = vrot.slane %v97, %v101
    %104 = vmatprep.subr.mxu0 0.0
    %105 = vmatpush1.msra.mxu0 %v81
    %106 = vmatprep.subr.mxu0 0.0
    %107 = vmatpush1.msra.mxu0 %v82
    %108 = vmatprep.subr.mxu0 0.0
    %109 = vmatpush1.msra.mxu0 %v83
    %110 = vmatprep.subr.mxu0 0.0
    %111 = vmatpush1.msra.mxu0 %v84
    %112 = vmatprep.subr.mxu0 0.0
    %113 = vmatpush1.msra.mxu0 %v85
    %114 = vmatprep.subr.mxu0 0.0
    %115 = vmatpush1.msra.mxu0 %v86
    %116 = vmatprep.subr.mxu0 0.0
    %117 = vmatpush1.msra.mxu0 %v87
    %118 = vmatprep.subr.mxu0 0.0
    %119 = vmatpush1.msra.mxu0 %v88
    %120 = vmatprep.subr.mxu0 0.0
    %121 = vmatpush1.msra.mxu0 %v89
    %122 = vmatprep.subr.mxu0 0.0
    %123 = vmatpush1.msra.mxu0 %v90
    %124 = vmatprep.subr.mxu0 0.0
    %125 = vmatpush1.msra.mxu0 %v91
    %126 = vmatprep.subr.mxu0 0.0
    %127 = vmatpush1.msra.mxu0 %v92
    %128 = vmatprep.subr.mxu0 0.0
    %129 = vmatpush1.msra.mxu0 %v93
    %130 = vmatprep.subr.mxu0 0.0
    %131 = vmatpush1.msra.mxu0 %v94
    %132 = vmatprep.subr.mxu0 0.0
    %133 = vmatpush1.msra.mxu0 %v95
    %134 = vmatprep.subr.mxu0 0.0
    %135 = vmatpush1.msra.mxu0 %v96
    %136 = vmatprep.subr.mxu0 0.0
    %137 = vmatpush1.msra.mxu0 0.0
    %138 = vmatprep.subr.mxu0 0.0
    %139 = vmatpush1.msra.mxu0 0.0
    %140 = vmatprep.subr.mxu0 0.0
    %141 = vmatpush1.msra.mxu0 0.0
    %142 = vmatprep.subr.mxu0 0.0
    %143 = vmatpush1.msra.mxu0 0.0
    %144 = vmatprep.subr.mxu0 0.0
    %145 = vmatpush1.msra.mxu0 0.0
    %146 = vmatprep.subr.mxu0 0.0
    %147 = vmatpush1.msra.mxu0 0.0
    %148 = vmatprep.subr.mxu0 0.0
    %149 = vmatpush1.msra.mxu0 0.0
    %150 = vmatprep.subr.mxu0 0.0
    %151 = vmatpush1.msra.mxu0 0.0
    %152 = vmatprep.subr.mxu0 0.0
    %153 = vmatpush1.msra.mxu0 0.0
    %154 = vmatprep.subr.mxu0 0.0
    %155 = vmatpush1.msra.mxu0 0.0
    %156 = vmatprep.subr.mxu0 0.0
    %157 = vmatpush1.msra.mxu0 0.0
    %158 = vmatprep.subr.mxu0 0.0
    %159 = vmatpush1.msra.mxu0 0.0
    %160 = vmatprep.subr.mxu0 0.0
    %161 = vmatpush1.msra.mxu0 0.0
    %162 = vmatprep.subr.mxu0 0.0
    %163 = vmatpush1.msra.mxu0 0.0
    %164 = vmatprep.subr.mxu0 0.0
    %165 = vmatpush1.msra.mxu0 0.0
    %166 = vmatprep.subr.mxu0 0.0
    %167 = vmatpush1.msra.mxu0 0.0
    %168 = vmatprep.mubr.f32.mxu0 0.0
    %169 = vmatmul.mubr.f32.gmra.mrb[0].mxu0 %v80
    %v170 = vpop.f32.mrb[0].mxu0
    %v171 = vadd.f32 %v102, %v170
    %v172 = vpop.f32.mrb[0].mxu0
    %173 = vdwg.mxu0
    %v174 = vld [vmem:[#allocation7] sm:$0xff]
    %v175 = vld [vmem:[#allocation7 + $0x8] sm:$0xff]
    %v176 = vld [vmem:[#allocation7 + $0x10] sm:$0xff]
    %v177 = vld [vmem:[#allocation7 + $0x18] sm:$0xff]
    %v178 = vld [vmem:[#allocation7 + $0x20] sm:$0xff]
    %v179 = vld [vmem:[#allocation7 + $0x28] sm:$0xff]
    %v180 = vld [vmem:[#allocation7 + $0x30] sm:$0xff]
    %v181 = vld [vmem:[#allocation7 + $0x38] sm:$0xff]
    %v182 = vld [vmem:[#allocation7 + $0x40] sm:$0xff]
    %v183 = vld [vmem:[#allocation7 + $0x48] sm:$0xff]
    %v184 = vld [vmem:[#allocation7 + $0x50] sm:$0xff]
    %v185 = vld [vmem:[#allocation7 + $0x58] sm:$0xff]
    %v186 = vld [vmem:[#allocation7 + $0x60] sm:$0xff]
    %v187 = vld [vmem:[#allocation7 + $0x68] sm:$0xff]
    %v188 = vld [vmem:[#allocation7 + $0x70] sm:$0xff]
    %v189 = vld [vmem:[#allocation7 + $0x78] sm:$0xff]
    %v190 = vld [vmem:[%s4] sm:$0x1]
    %v192 = vlaneseq
    %v193 = vshrl.u32 %v192, 7
    %v194 = vsub.s32 0, %v193
    %v195 = vrot.slane %v190, %v194
    %197 = vmatprep.subr.mxu0 0.0
    %198 = vmatpush1.msra.mxu0 %v174
    %199 = vmatprep.subr.mxu0 0.0
    %200 = vmatpush1.msra.mxu0 %v175
    %201 = vmatprep.subr.mxu0 0.0
    %202 = vmatpush1.msra.mxu0 %v176
    %203 = vmatprep.subr.mxu0 0.0
    %204 = vmatpush1.msra.mxu0 %v177
    %205 = vmatprep.subr.mxu0 0.0
    %206 = vmatpush1.msra.mxu0 %v178
    %207 = vmatprep.subr.mxu0 0.0
    %208 = vmatpush1.msra.mxu0 %v179
    %209 = vmatprep.subr.mxu0 0.0
    %210 = vmatpush1.msra.mxu0 %v180
    %211 = vmatprep.subr.mxu0 0.0
    %212 = vmatpush1.msra.mxu0 %v181
    %213 = vmatprep.subr.mxu0 0.0
    %214 = vmatpush1.msra.mxu0 %v182
    %215 = vmatprep.subr.mxu0 0.0
    %216 = vmatpush1.msra.mxu0 %v183
    %217 = vmatprep.subr.mxu0 0.0
    %218 = vmatpush1.msra.mxu0 %v184
    %219 = vmatprep.subr.mxu0 0.0
    %220 = vmatpush1.msra.mxu0 %v185
    %221 = vmatprep.subr.mxu0 0.0
    %222 = vmatpush1.msra.mxu0 %v186
    %223 = vmatprep.subr.mxu0 0.0
    %224 = vmatpush1.msra.mxu0 %v187
    %225 = vmatprep.subr.mxu0 0.0
    %226 = vmatpush1.msra.mxu0 %v188
    %227 = vmatprep.subr.mxu0 0.0
    %228 = vmatpush1.msra.mxu0 %v189
    %229 = vmatprep.subr.mxu0 0.0
    %230 = vmatpush1.msra.mxu0 0.0
    %231 = vmatprep.subr.mxu0 0.0
    %232 = vmatpush1.msra.mxu0 0.0
    %233 = vmatprep.subr.mxu0 0.0
    %234 = vmatpush1.msra.mxu0 0.0
    %235 = vmatprep.subr.mxu0 0.0
    %236 = vmatpush1.msra.mxu0 0.0
    %237 = vmatprep.subr.mxu0 0.0
    %238 = vmatpush1.msra.mxu0 0.0
    %239 = vmatprep.subr.mxu0 0.0
    %240 = vmatpush1.msra.mxu0 0.0
    %241 = vmatprep.subr.mxu0 0.0
    %242 = vmatpush1.msra.mxu0 0.0
    %243 = vmatprep.subr.mxu0 0.0
    %244 = vmatpush1.msra.mxu0 0.0
    %245 = vmatprep.subr.mxu0 0.0
    %246 = vmatpush1.msra.mxu0 0.0
    %247 = vmatprep.subr.mxu0 0.0
    %248 = vmatpush1.msra.mxu0 0.0
    %249 = vmatprep.subr.mxu0 0.0
    %250 = vmatpush1.msra.mxu0 0.0
    %251 = vmatprep.subr.mxu0 0.0
    %252 = vmatpush1.msra.mxu0 0.0
    %253 = vmatprep.subr.mxu0 0.0
    %254 = vmatpush1.msra.mxu0 0.0
    %255 = vmatprep.subr.mxu0 0.0
    %256 = vmatpush1.msra.mxu0 0.0
    %257 = vmatprep.subr.mxu0 0.0
    %258 = vmatpush1.msra.mxu0 0.0
    %259 = vmatprep.subr.mxu0 0.0
    %260 = vmatpush1.msra.mxu0 0.0
    %261 = vmatprep.mubr.f32.mxu0 0.0
    %262 = vmatmul.mubr.f32.gmra.mrb[0].mxu0 %v171
    %v263 = vpop.f32.mrb[0].mxu0
    %v264 = vadd.f32 %v195, %v263
    %v265 = vpop.f32.mrb[0].mxu0
    %266 = vdwg.mxu0
    %v267 = vmax.f32 %v264, 0.0
    %v268 = vld [vmem:[#allocation8] sm:$0xff]
    %v269 = vld [vmem:[#allocation8 + $0x8] sm:$0xff]
    %v270 = vld [vmem:[#allocation8 + $0x10] sm:$0xff]
    %v271 = vld [vmem:[#allocation8 + $0x18] sm:$0xff]
    %v272 = vld [vmem:[#allocation8 + $0x20] sm:$0xff]
    %v273 = vld [vmem:[#allocation8 + $0x28] sm:$0xff]
    %v274 = vld [vmem:[#allocation8 + $0x30] sm:$0xff]
    %v275 = vld [vmem:[#allocation8 + $0x38] sm:$0xff]
    %v276 = vld [vmem:[#allocation8 + $0x40] sm:$0xff]
    %v277 = vld [vmem:[#allocation8 + $0x48] sm:$0xff]
    %v278 = vld [vmem:[#allocation8 + $0x50] sm:$0xff]
    %v279 = vld [vmem:[#allocation8 + $0x58] sm:$0xff]
    %v280 = vld [vmem:[#allocation8 + $0x60] sm:$0xff]
    %v281 = vld [vmem:[#allocation8 + $0x68] sm:$0xff]
    %v282 = vld [vmem:[#allocation8 + $0x70] sm:$0xff]
    %v283 = vld [vmem:[#allocation8 + $0x78] sm:$0xff]
    %v284 = vld [vmem:[%s6] sm:$0x1]
    %v286 = vlaneseq
    %v287 = vshrl.u32 %v286, 7
    %v288 = vsub.s32 0, %v287
    %v289 = vrot.slane %v284, %v288
    %291 = vmatprep.subr.mxu0 0.0
    %292 = vmatpush1.msra.mxu0 %v268
    %293 = vmatprep.subr.mxu0 0.0
    %294 = vmatpush1.msra.mxu0 %v269
    %295 = vmatprep.subr.mxu0 0.0
    %296 = vmatpush1.msra.mxu0 %v270
    %297 = vmatprep.subr.mxu0 0.0
    %298 = vmatpush1.msra.mxu0 %v271
    %299 = vmatprep.subr.mxu0 0.0
    %300 = vmatpush1.msra.mxu0 %v272
    %301 = vmatprep.subr.mxu0 0.0
    %302 = vmatpush1.msra.mxu0 %v273
    %303 = vmatprep.subr.mxu0 0.0
    %304 = vmatpush1.msra.mxu0 %v274
    %305 = vmatprep.subr.mxu0 0.0
    %306 = vmatpush1.msra.mxu0 %v275
    %307 = vmatprep.subr.mxu0 0.0
    %308 = vmatpush1.msra.mxu0 %v276
    %309 = vmatprep.subr.mxu0 0.0
    %310 = vmatpush1.msra.mxu0 %v277
    %311 = vmatprep.subr.mxu0 0.0
    %312 = vmatpush1.msra.mxu0 %v278
    %313 = vmatprep.subr.mxu0 0.0
    %314 = vmatpush1.msra.mxu0 %v279
    %315 = vmatprep.subr.mxu0 0.0
    %316 = vmatpush1.msra.mxu0 %v280
    %317 = vmatprep.subr.mxu0 0.0
    %318 = vmatpush1.msra.mxu0 %v281
    %319 = vmatprep.subr.mxu0 0.0
    %320 = vmatpush1.msra.mxu0 %v282
    %321 = vmatprep.subr.mxu0 0.0
    %322 = vmatpush1.msra.mxu0 %v283
    %323 = vmatprep.subr.mxu0 0.0
    %324 = vmatpush1.msra.mxu0 0.0
    %325 = vmatprep.subr.mxu0 0.0
    %326 = vmatpush1.msra.mxu0 0.0
    %327 = vmatprep.subr.mxu0 0.0
    %328 = vmatpush1.msra.mxu0 0.0
    %329 = vmatprep.subr.mxu0 0.0
    %330 = vmatpush1.msra.mxu0 0.0
    %331 = vmatprep.subr.mxu0 0.0
    %332 = vmatpush1.msra.mxu0 0.0
    %333 = vmatprep.subr.mxu0 0.0
    %334 = vmatpush1.msra.mxu0 0.0
    %335 = vmatprep.subr.mxu0 0.0
    %336 = vmatpush1.msra.mxu0 0.0
    %337 = vmatprep.subr.mxu0 0.0
    %338 = vmatpush1.msra.mxu0 0.0
    %339 = vmatprep.subr.mxu0 0.0
    %340 = vmatpush1.msra.mxu0 0.0
    %341 = vmatprep.subr.mxu0 0.0
    %342 = vmatpush1.msra.mxu0 0.0
    %343 = vmatprep.subr.mxu0 0.0
    %344 = vmatpush1.msra.mxu0 0.0
    %345 = vmatprep.subr.mxu0 0.0
    %346 = vmatpush1.msra.mxu0 0.0
    %347 = vmatprep.subr.mxu0 0.0
    %348 = vmatpush1.msra.mxu0 0.0
    %349 = vmatprep.subr.mxu0 0.0
    %350 = vmatpush1.msra.mxu0 0.0
    %351 = vmatprep.subr.mxu0 0.0
    %352 = vmatpush1.msra.mxu0 0.0
    %353 = vmatprep.subr.mxu0 0.0
    %354 = vmatpush1.msra.mxu0 0.0
    %355 = vmatprep.mubr.f32.mxu0 0.0
    %356 = vmatmul.mubr.f32.gmra.mrb[0].mxu0 %v267
    %v357 = vpop.f32.mrb[0].mxu0
    %v358 = vadd.f32 %v289, %v357
    %v359 = vpop.f32.mrb[0].mxu0
    %360 = vdwg.mxu0
    %v361 = vmax.f32 %v358, 0.0
    %v362 = vadd.f32 %v171, %v361
    %s363 = scalar_lea.vmem [#allocation7], 128
    %v364 = vld [vmem:[%s363] sm:$0xff]
    %v365 = vld [vmem:[%s363 + $0x8] sm:$0xff]
    %v366 = vld [vmem:[%s363 + $0x10] sm:$0xff]
    %v367 = vld [vmem:[%s363 + $0x18] sm:$0xff]
    %v368 = vld [vmem:[%s363 + $0x20] sm:$0xff]
    %v369 = vld [vmem:[%s363 + $0x28] sm:$0xff]
    %v370 = vld [vmem:[%s363 + $0x30] sm:$0xff]
    %v371 = vld [vmem:[%s363 + $0x38] sm:$0xff]
    %v372 = vld [vmem:[%s363 + $0x40] sm:$0xff]
    %v373 = vld [vmem:[%s363 + $0x48] sm:$0xff]
    %v374 = vld [vmem:[%s363 + $0x50] sm:$0xff]
    %v375 = vld [vmem:[%s363 + $0x58] sm:$0xff]
    %v376 = vld [vmem:[%s363 + $0x60] sm:$0xff]
    %v377 = vld [vmem:[%s363 + $0x68] sm:$0xff]
    %v378 = vld [vmem:[%s363 + $0x70] sm:$0xff]
    %v379 = vld [vmem:[%s363 + $0x78] sm:$0xff]
    %s380 = scalar_lea.vmem %s4, 1
    %v381 = vld [vmem:[%s380] sm:$0x1]
    %v383 = vlaneseq
    %v384 = vshrl.u32 %v383, 7
    %v385 = vsub.s32 0, %v384
    %v386 = vrot.slane %v381, %v385
    %388 = vmatprep.subr.mxu0 0.0
    %389 = vmatpush1.msra.mxu0 %v364
    %390 = vmatprep.subr.mxu0 0.0
    %391 = vmatpush1.msra.mxu0 %v365
    %392 = vmatprep.subr.mxu0 0.0
    %393 = vmatpush1.msra.mxu0 %v366
    %394 = vmatprep.subr.mxu0 0.0
    %395 = vmatpush1.msra.mxu0 %v367
    %396 = vmatprep.subr.mxu0 0.0
    %397 = vmatpush1.msra.mxu0 %v368
    %398 = vmatprep.subr.mxu0 0.0
    %399 = vmatpush1.msra.mxu0 %v369
    %400 = vmatprep.subr.mxu0 0.0
    %401 = vmatpush1.msra.mxu0 %v370
    %402 = vmatprep.subr.mxu0 0.0
    %403 = vmatpush1.msra.mxu0 %v371
    %404 = vmatprep.subr.mxu0 0.0
    %405 = vmatpush1.msra.mxu0 %v372
    %406 = vmatprep.subr.mxu0 0.0
    %407 = vmatpush1.msra.mxu0 %v373
    %408 = vmatprep.subr.mxu0 0.0
    %409 = vmatpush1.msra.mxu0 %v374
    %410 = vmatprep.subr.mxu0 0.0
    %411 = vmatpush1.msra.mxu0 %v375
    %412 = vmatprep.subr.mxu0 0.0
    %413 = vmatpush1.msra.mxu0 %v376
    %414 = vmatprep.subr.mxu0 0.0
    %415 = vmatpush1.msra.mxu0 %v377
    %416 = vmatprep.subr.mxu0 0.0
    %417 = vmatpush1.msra.mxu0 %v378
    %418 = vmatprep.subr.mxu0 0.0
    %419 = vmatpush1.msra.mxu0 %v379
    %420 = vmatprep.subr.mxu0 0.0
    %421 = vmatpush1.msra.mxu0 0.0
    %422 = vmatprep.subr.mxu0 0.0
    %423 = vmatpush1.msra.mxu0 0.0
    %424 = vmatprep.subr.mxu0 0.0
    %425 = vmatpush1.msra.mxu0 0.0
    %426 = vmatprep.subr.mxu0 0.0
    %427 = vmatpush1.msra.mxu0 0.0
    %428 = vmatprep.subr.mxu0 0.0
    %429 = vmatpush1.msra.mxu0 0.0
    %430 = vmatprep.subr.mxu0 0.0
    %431 = vmatpush1.msra.mxu0 0.0
    %432 = vmatprep.subr.mxu0 0.0
    %433 = vmatpush1.msra.mxu0 0.0
    %434 = vmatprep.subr.mxu0 0.0
    %435 = vmatpush1.msra.mxu0 0.0
    %436 = vmatprep.subr.mxu0 0.0
    %437 = vmatpush1.msra.mxu0 0.0
    %438 = vmatprep.subr.mxu0 0.0
    %439 = vmatpush1.msra.mxu0 0.0
    %440 = vmatprep.subr.mxu0 0.0
    %441 = vmatpush1.msra.mxu0 0.0
    %442 = vmatprep.subr.mxu0 0.0
    %443 = vmatpush1.msra.mxu0 0.0
    %444 = vmatprep.subr.mxu0 0.0
    %445 = vmatpush1.msra.mxu0 0.0
    %446 = vmatprep.subr.mxu0 0.0
    %447 = vmatpush1.msra.mxu0 0.0
    %448 = vmatprep.subr.mxu0 0.0
    %449 = vmatpush1.msra.mxu0 0.0
    %450 = vmatprep.subr.mxu0 0.0
    %451 = vmatpush1.msra.mxu0 0.0
    %452 = vmatprep.mubr.f32.mxu0 0.0
    %453 = vmatmul.mubr.f32.gmra.mrb[0].mxu0 %v362
    %v454 = vpop.f32.mrb[0].mxu0
    %v455 = vadd.f32 %v386, %v454
    %v456 = vpop.f32.mrb[0].mxu0
    %457 = vdwg.mxu0
    %v458 = vmax.f32 %v455, 0.0
    %s459 = scalar_lea.vmem [#allocation8], 128
    %v460 = vld [vmem:[%s459] sm:$0xff]
    %v461 = vld [vmem:[%s459 + $0x8] sm:$0xff]
    %v462 = vld [vmem:[%s459 + $0x10] sm:$0xff]
    %v463 = vld [vmem:[%s459 + $0x18] sm:$0xff]
    %v464 = vld [vmem:[%s459 + $0x20] sm:$0xff]
    %v465 = vld [vmem:[%s459 + $0x28] sm:$0xff]
    %v466 = vld [vmem:[%s459 + $0x30] sm:$0xff]
    %v467 = vld [vmem:[%s459 + $0x38] sm:$0xff]
    %v468 = vld [vmem:[%s459 + $0x40] sm:$0xff]
    %v469 = vld [vmem:[%s459 + $0x48] sm:$0xff]
    %v470 = vld [vmem:[%s459 + $0x50] sm:$0xff]
    %v471 = vld [vmem:[%s459 + $0x58] sm:$0xff]
    %v472 = vld [vmem:[%s459 + $0x60] sm:$0xff]
    %v473 = vld [vmem:[%s459 + $0x68] sm:$0xff]
    %v474 = vld [vmem:[%s459 + $0x70] sm:$0xff]
    %v475 = vld [vmem:[%s459 + $0x78] sm:$0xff]
    %s476 = scalar_lea.vmem %s6, 1
    %v477 = vld [vmem:[%s476] sm:$0x1]
    %v479 = vlaneseq
    %v480 = vshrl.u32 %v479, 7
    %v481 = vsub.s32 0, %v480
    %v482 = vrot.slane %v477, %v481
    %484 = vmatprep.subr.mxu0 0.0
    %485 = vmatpush1.msra.mxu0 %v460
    %486 = vmatprep.subr.mxu0 0.0
    %487 = vmatpush1.msra.mxu0 %v461
    %488 = vmatprep.subr.mxu0 0.0
    %489 = vmatpush1.msra.mxu0 %v462
    %490 = vmatprep.subr.mxu0 0.0
    %491 = vmatpush1.msra.mxu0 %v463
    %492 = vmatprep.subr.mxu0 0.0
    %493 = vmatpush1.msra.mxu0 %v464
    %494 = vmatprep.subr.mxu0 0.0
    %495 = vmatpush1.msra.mxu0 %v465
    %496 = vmatprep.subr.mxu0 0.0
    %497 = vmatpush1.msra.mxu0 %v466
    %498 = vmatprep.subr.mxu0 0.0
    %499 = vmatpush1.msra.mxu0 %v467
    %500 = vmatprep.subr.mxu0 0.0
    %501 = vmatpush1.msra.mxu0 %v468
    %502 = vmatprep.subr.mxu0 0.0
    %503 = vmatpush1.msra.mxu0 %v469
    %504 = vmatprep.subr.mxu0 0.0
    %505 = vmatpush1.msra.mxu0 %v470
    %506 = vmatprep.subr.mxu0 0.0
    %507 = vmatpush1.msra.mxu0 %v471
    %508 = vmatprep.subr.mxu0 0.0
    %509 = vmatpush1.msra.mxu0 %v472
    %510 = vmatprep.subr.mxu0 0.0
    %511 = vmatpush1.msra.mxu0 %v473
    %512 = vmatprep.subr.mxu0 0.0
    %513 = vmatpush1.msra.mxu0 %v474
    %514 = vmatprep.subr.mxu0 0.0
    %515 = vmatpush1.msra.mxu0 %v475
    %516 = vmatprep.subr.mxu0 0.0
    %517 = vmatpush1.msra.mxu0 0.0
    %518 = vmatprep.subr.mxu0 0.0
    %519 = vmatpush1.msra.mxu0 0.0
    %520 = vmatprep.subr.mxu0 0.0
    %521 = vmatpush1.msra.mxu0 0.0
    %522 = vmatprep.subr.mxu0 0.0
    %523 = vmatpush1.msra.mxu0 0.0
    %524 = vmatprep.subr.mxu0 0.0
    %525 = vmatpush1.msra.mxu0 0.0
    %526 = vmatprep.subr.mxu0 0.0
    %527 = vmatpush1.msra.mxu0 0.0
    %528 = vmatprep.subr.mxu0 0.0
    %529 = vmatpush1.msra.mxu0 0.0
    %530 = vmatprep.subr.mxu0 0.0
    %531 = vmatpush1.msra.mxu0 0.0
    %532 = vmatprep.subr.mxu0 0.0
    %533 = vmatpush1.msra.mxu0 0.0
    %534 = vmatprep.subr.mxu0 0.0
    %535 = vmatpush1.msra.mxu0 0.0
    %536 = vmatprep.subr.mxu0 0.0
    %537 = vmatpush1.msra.mxu0 0.0
    %538 = vmatprep.subr.mxu0 0.0
    %539 = vmatpush1.msra.mxu0 0.0
    %540 = vmatprep.subr.mxu0 0.0
    %541 = vmatpush1.msra.mxu0 0.0
    %542 = vmatprep.subr.mxu0 0.0
    %543 = vmatpush1.msra.mxu0 0.0
    %544 = vmatprep.subr.mxu0 0.0
    %545 = vmatpush1.msra.mxu0 0.0
    %546 = vmatprep.subr.mxu0 0.0
    %547 = vmatpush1.msra.mxu0 0.0
    %548 = vmatprep.mubr.f32.mxu0 0.0
    %549 = vmatmul.mubr.f32.gmra.mrb[0].mxu0 %v458
    %v550 = vpop.f32.mrb[0].mxu0
    %v551 = vadd.f32 %v482, %v550
    %v552 = vpop.f32.mrb[0].mxu0
    %553 = vdwg.mxu0
    %v554 = vmax.f32 %v551, 0.0
    %v555 = vadd.f32 %v362, %v554
    %556 = vst [vmem:[#allocation10] sm:$0xff] %v555
    // Predicated region
    $region46: #{tpu_custom_call.1} parent=1 // pred_check
      _
    $region47: #{tpu_custom_call.1} parent=1 // pred_check_branch
      %558 = sbr.rel (0) target = $region49
    $region48: #{tpu_custom_call.1} parent=1 // pred_region
      %s560 = ssub.s32 128, 128
      %561 = vsyncadd [#allocation4], %s560
      %s563 = sshll.u32 [#allocation10], 4
      %s564 = int_to_ptr.vmem [resolvable:$true] %s563
      %566 = dma.vmem_to_hbm [thread:$0]  %s564, 128, %s7, [#allocation4]
    $region49: #{tpu_custom_call.1} parent=1 // pred_fallthru
      _
    // Predicated region
    $region50: #{tpu_custom_call.1} parent=1 // pred_check
      _
    $region51: #{tpu_custom_call.1} parent=1 // pred_check_branch
      %568 = sbr.rel (0) target = $region53
    $region52: #{tpu_custom_call.1} parent=1 // pred_region
      %569 = dma.done [#allocation4], 128
    $region53: #{tpu_custom_call.1} parent=1 // pred_fallthru
      _
    %570 = vsyncpa [#allocation3], 1
    %571 = vsyncpa [#allocation6], 1
    %572 = vsyncpa [#allocation9], 1
    %573 = vsyncpa [#allocation4], 1

// kernel: tpu_custom_call.1
$region0: #{tpu_custom_call.1}
  #allocation0 [shape = 'u32[]', space=smem, size = 0x4, offset = 0x4, fixed_abs, tag = 'smem constant byte address 0x4 - core index']
  #allocation1 [shape = 'u32[144,128]{1,0:T(1,128)}', space=vmem, size = 0x12000, scoped, tag = 'internal scratch']
  %s0 = inlined_call_operand.hbm [shape: f32[8,128], index: 0, kind: input, shape index: {}]
  %s1 = inlined_call_operand.hbm [shape: f32[128,128], index: 1, kind: input, shape index: {}]
  %s2 = inlined_call_operand.vmem [shape: f32[1,128], index: 2, kind: input, shape index: {}]
  %s3 = inlined_call_operand.hbm [shape: f32[2,128,128], index: 3, kind: input, shape index: {}]
  %s4 = inlined_call_operand.vmem [shape: f32[2,1,128], index: 4, kind: input, shape index: {}]
  %s5 = inlined_call_operand.hbm [shape: f32[2,128,128], index: 5, kind: input, shape index: {}]
  %s6 = inlined_call_operand.vmem [shape: f32[2,1,128], index: 6, kind: input, shape index: {}]
  %s7 = inlined_call_operand.hbm [shape: f32[8,128], index: 7, kind: output, shape index: {}]
  %s8 = sld [smem:[#allocation0]]
  $region54: #{tpu_custom_call.1} parent=0
    _
  %s10 = ssub.s32 1, %s8
  %s11 = scalar_select 0, %s10, %s8
  $region1: #{tpu_custom_call.1} parent=0
    #allocation2 [shape = 'u8[4096]{0}', space=vmem, size = 0x1000, scoped, tag = 'input window, operand 0, single buffered']
    #allocation3 [shape = 's32[1]{0}', space=sflag, size = 0x4, scoped, tag = 'scoped memory for tpu_custom_call.1']
    #allocation4 [shape = 's32[1]{0}', space=sflag, size = 0x4, scoped, tag = 'scoped memory for tpu_custom_call.1']
    #allocation5 [shape = 'u8[65536]{0}', space=vmem, size = 0x10000, scoped, tag = 'input window, operand 1, single buffered']
    #allocation6 [shape = 's32[1]{0}', space=sflag, size = 0x4, scoped, tag = 'scoped memory for tpu_custom_call.1']
    #allocation7 [shape = 'u8[131072]{0}', space=vmem, size = 0x20000, scoped, tag = 'input window, operand 3, single buffered']
    #allocation8 [shape = 'u8[131072]{0}', space=vmem, size = 0x20000, scoped, tag = 'input window, operand 5, single buffered']
    #allocation9 [shape = 's32[1]{0}', space=sflag, size = 0x4, scoped, tag = 'scoped memory for tpu_custom_call.1']
    #allocation10 [shape = 'u8[4096]{0}', space=vmem, size = 0x1000, scoped, tag = 'output window, operand 0, single buffered']
    %12 = vsyncpa [#allocation3], 0
    %13 = vsyncpa [#allocation6], 0
    %14 = vsyncpa [#allocation9], 0
    %15 = vsyncpa [#allocation4], 0
    // Predicated region
    $region2: #{tpu_custom_call.1} parent=1 // pred_check
      _
    $region3: #{tpu_custom_call.1} parent=1 // pred_check_branch
      %17 = sbr.rel (0) target = $region5
    $region4: #{tpu_custom_call.1} parent=1 // pred_region
      %s19 = ssub.s32 128, 128
      %20 = vsyncadd [#allocation3], %s19
      %s22 = sshll.u32 [#allocation2], 4
      %s23 = int_to_ptr.vmem [resolvable:$true] %s22
      %25 = dma.hbm_to_vmem [thread:$0]  %s0, 128, %s23, [#allocation3]
    $region5: #{tpu_custom_call.1} parent=1 // pred_fallthru
      _
    // Predicated region
    $region6: #{tpu_custom_call.1} parent=1 // pred_check
      _
    $region7: #{tpu_custom_call.1} parent=1 // pred_check_branch
      %27 = sbr.rel (0) target = $region9
    $region8: #{tpu_custom_call.1} parent=1 // pred_region
      %s29 = ssub.s32 2048, 2048
      %30 = vsyncadd [#allocation6], %s29
      %s31 = sshll.u32 [#allocation5], 4
      %s32 = int_to_ptr.vmem [resolvable:$true] %s31
      %37 = dma.hbm_to_vmem [thread:$0]  %s1, 2048, %s32, [#allocation6], 128, 128, 8
    $region9: #{tpu_custom_call.1} parent=1 // pred_fallthru
      _
    // Predicated region
    $region10: #{tpu_custom_call.1} parent=1 // pred_check
      _
    $region11: #{tpu_custom_call.1} parent=1 // pred_check_branch
      %39 = sbr.rel (0) target = $region13
    $region12: #{tpu_custom_call.1} parent=1 // pred_region
      _
    $region13: #{tpu_custom_call.1} parent=1 // pred_fallthru
      _
    // Predicated region
    $region14: #{tpu_custom_call.1} parent=1 // pred_check
      _
    $region15: #{tpu_custom_call.1} parent=1 // pred_check_branch
      %41 = sbr.rel (0) target = $region17
    $region16: #{tpu_custom_call.1} parent=1 // pred_region
      %s43 = ssub.s32 4096, 4096
      %44 = vsyncadd [#allocation6], %s43
      %s45 = sshll.u32 [#allocation7], 4
      %s46 = int_to_ptr.vmem [resolvable:$true] %s45
      %51 = dma.hbm_to_vmem [thread:$0]  %s3, 4096, %s46, [#allocation6], 128, 128, 8
    $region17: #{tpu_custom_call.1} parent=1 // pred_fallthru
      _
    // Predicated region
    $region18: #{tpu_custom_call.1} parent=1 // pred_check
      _
    $region19: #{tpu_custom_call.1} parent=1 // pred_check_branch
      %53 = sbr.rel (0) target = $region21
    $region20: #{tpu_custom_call.1} parent=1 // pred_region
      _
    $region21: #{tpu_custom_call.1} parent=1 // pred_fallthru
      _
    // Predicated region
    $region22: #{tpu_custom_call.1} parent=1 // pred_check
      _
    $region23: #{tpu_custom_call.1} parent=1 // pred_check_branch
      %55 = sbr.rel (0) target = $region25
    $region24: #{tpu_custom_call.1} parent=1 // pred_region
      %s57 = ssub.s32 4096, 4096
      %58 = vsyncadd [#allocation9], %s57
      %s59 = sshll.u32 [#allocation8], 4
      %s60 = int_to_ptr.vmem [resolvable:$true] %s59
      %65 = dma.hbm_to_vmem [thread:$0]  %s5, 4096, %s60, [#allocation9], 128, 128, 8
    $region25: #{tpu_custom_call.1} parent=1 // pred_fallthru
      _
    // Predicated region
    $region26: #{tpu_custom_call.1} parent=1 // pred_check
      _
    $region27: #{tpu_custom_call.1} parent=1 // pred_check_branch
      %67 = sbr.rel (0) target = $region29
    $region28: #{tpu_custom_call.1} parent=1 // pred_region
      _
    $region29: #{tpu_custom_call.1} parent=1 // pred_fallthru
      _
    // Predicated region
    $region30: #{tpu_custom_call.1} parent=1 // pred_check
      _
    $region31: #{tpu_custom_call.1} parent=1 // pred_check_branch
      %69 = sbr.rel (0) target = $region33
    $region32: #{tpu_custom_call.1} parent=1 // pred_region
      %70 = dma.done [#allocation3], 128
    $region33: #{tpu_custom_call.1} parent=1 // pred_fallthru
      _
    // Predicated region
    $region34: #{tpu_custom_call.1} parent=1 // pred_check
      _
    $region35: #{tpu_custom_call.1} parent=1 // pred_check_branch
      %72 = sbr.rel (0) target = $region37
    $region36: #{tpu_custom_call.1} parent=1 // pred_region
      %73 = dma.done [#allocation6], 2048
    $region37: #{tpu_custom_call.1} parent=1 // pred_fallthru
      _
    // Predicated region
    $region38: #{tpu_custom_call.1} parent=1 // pred_check
      _
    $region39: #{tpu_custom_call.1} parent=1 // pred_check_branch
      %75 = sbr.rel (0) target = $region41
    $region40: #{tpu_custom_call.1} parent=1 // pred_region
      %76 = dma.done [#allocation6], 4096
    $region41: #{tpu_custom_call.1} parent=1 // pred_fallthru
      _
    // Predicated region
    $region42: #{tpu_custom_call.1} parent=1 // pred_check
      _
    $region43: #{tpu_custom_call.1} parent=1 // pred_check_branch
      %78 = sbr.rel (0) target = $region45
    $region44: #{tpu_custom_call.1} parent=1 // pred_region
      %79 = dma.done [#allocation9], 4096
    $region45: #{tpu_custom_call.1} parent=1 // pred_fallthru
      _
    %v80 = vld [vmem:[#allocation2] sm:$0xff]
    %v81 = vld [vmem:[#allocation5] sm:$0xff]
    %v82 = vld [vmem:[#allocation5 + $0x8] sm:$0xff]
    %v83 = vld [vmem:[#allocation5 + $0x10] sm:$0xff]
    %v84 = vld [vmem:[#allocation5 + $0x18] sm:$0xff]
    %v85 = vld [vmem:[#allocation5 + $0x20] sm:$0xff]
    %v86 = vld [vmem:[#allocation5 + $0x28] sm:$0xff]
    %v87 = vld [vmem:[#allocation5 + $0x30] sm:$0xff]
    %v88 = vld [vmem:[#allocation5 + $0x38] sm:$0xff]
    %v89 = vld [vmem:[#allocation5 + $0x40] sm:$0xff]
    %v90 = vld [vmem:[#allocation5 + $0x48] sm:$0xff]
    %v91 = vld [vmem:[#allocation5 + $0x50] sm:$0xff]
    %v92 = vld [vmem:[#allocation5 + $0x58] sm:$0xff]
    %v93 = vld [vmem:[#allocation5 + $0x60] sm:$0xff]
    %v94 = vld [vmem:[#allocation5 + $0x68] sm:$0xff]
    %v95 = vld [vmem:[#allocation5 + $0x70] sm:$0xff]
    %v96 = vld [vmem:[#allocation5 + $0x78] sm:$0xff]
    %v97 = vld [vmem:[%s2] sm:$0x1]
    %v99 = vlaneseq
    %v100 = vshrl.u32 %v99, 7
    %v101 = vsub.s32 0, %v100
    %v102 = vrot.slane %v97, %v101
    %104 = vmatprep.subr.mxu0 0.0
    %105 = vmatpush1.msra.mxu0 %v81
    %106 = vmatprep.subr.mxu0 0.0
    %107 = vmatpush1.msra.mxu0 %v82
    %108 = vmatprep.subr.mxu0 0.0
    %109 = vmatpush1.msra.mxu0 %v83
    %110 = vmatprep.subr.mxu0 0.0
    %111 = vmatpush1.msra.mxu0 %v84
    %112 = vmatprep.subr.mxu0 0.0
    %113 = vmatpush1.msra.mxu0 %v85
    %114 = vmatprep.subr.mxu0 0.0
    %115 = vmatpush1.msra.mxu0 %v86
    %116 = vmatprep.subr.mxu0 0.0
    %117 = vmatpush1.msra.mxu0 %v87
    %118 = vmatprep.subr.mxu0 0.0
    %119 = vmatpush1.msra.mxu0 %v88
    %120 = vmatprep.subr.mxu0 0.0
    %121 = vmatpush1.msra.mxu0 %v89
    %122 = vmatprep.subr.mxu0 0.0
    %123 = vmatpush1.msra.mxu0 %v90
    %124 = vmatprep.subr.mxu0 0.0
    %125 = vmatpush1.msra.mxu0 %v91
    %126 = vmatprep.subr.mxu0 0.0
    %127 = vmatpush1.msra.mxu0 %v92
    %128 = vmatprep.subr.mxu0 0.0
    %129 = vmatpush1.msra.mxu0 %v93
    %130 = vmatprep.subr.mxu0 0.0
    %131 = vmatpush1.msra.mxu0 %v94
    %132 = vmatprep.subr.mxu0 0.0
    %133 = vmatpush1.msra.mxu0 %v95
    %134 = vmatprep.subr.mxu0 0.0
    %135 = vmatpush1.msra.mxu0 %v96
    %136 = vmatprep.subr.mxu0 0.0
    %137 = vmatpush1.msra.mxu0 0.0
    %138 = vmatprep.subr.mxu0 0.0
    %139 = vmatpush1.msra.mxu0 0.0
    %140 = vmatprep.subr.mxu0 0.0
    %141 = vmatpush1.msra.mxu0 0.0
    %142 = vmatprep.subr.mxu0 0.0
    %143 = vmatpush1.msra.mxu0 0.0
    %144 = vmatprep.subr.mxu0 0.0
    %145 = vmatpush1.msra.mxu0 0.0
    %146 = vmatprep.subr.mxu0 0.0
    %147 = vmatpush1.msra.mxu0 0.0
    %148 = vmatprep.subr.mxu0 0.0
    %149 = vmatpush1.msra.mxu0 0.0
    %150 = vmatprep.subr.mxu0 0.0
    %151 = vmatpush1.msra.mxu0 0.0
    %152 = vmatprep.subr.mxu0 0.0
    %153 = vmatpush1.msra.mxu0 0.0
    %154 = vmatprep.subr.mxu0 0.0
    %155 = vmatpush1.msra.mxu0 0.0
    %156 = vmatprep.subr.mxu0 0.0
    %157 = vmatpush1.msra.mxu0 0.0
    %158 = vmatprep.subr.mxu0 0.0
    %159 = vmatpush1.msra.mxu0 0.0
    %160 = vmatprep.subr.mxu0 0.0
    %161 = vmatpush1.msra.mxu0 0.0
    %162 = vmatprep.subr.mxu0 0.0
    %163 = vmatpush1.msra.mxu0 0.0
    %164 = vmatprep.subr.mxu0 0.0
    %165 = vmatpush1.msra.mxu0 0.0
    %166 = vmatprep.subr.mxu0 0.0
    %167 = vmatpush1.msra.mxu0 0.0
    %168 = vmatprep.mubr.f32.mxu0 0.0
    %169 = vmatmul.mubr.f32.gmra.mrb[0].mxu0 %v80
    %v170 = vpop.f32.mrb[0].mxu0
    %v171 = vadd.f32 %v102, %v170
    %v172 = vpop.f32.mrb[0].mxu0
    %173 = vdwg.mxu0
    %v174 = vld [vmem:[#allocation7] sm:$0xff]
    %v175 = vld [vmem:[#allocation7 + $0x8] sm:$0xff]
    %v176 = vld [vmem:[#allocation7 + $0x10] sm:$0xff]
    %v177 = vld [vmem:[#allocation7 + $0x18] sm:$0xff]
    %v178 = vld [vmem:[#allocation7 + $0x20] sm:$0xff]
    %v179 = vld [vmem:[#allocation7 + $0x28] sm:$0xff]
    %v180 = vld [vmem:[#allocation7 + $0x30] sm:$0xff]
    %v181 = vld [vmem:[#allocation7 + $0x38] sm:$0xff]
    %v182 = vld [vmem:[#allocation7 + $0x40] sm:$0xff]
    %v183 = vld [vmem:[#allocation7 + $0x48] sm:$0xff]
    %v184 = vld [vmem:[#allocation7 + $0x50] sm:$0xff]
    %v185 = vld [vmem:[#allocation7 + $0x58] sm:$0xff]
    %v186 = vld [vmem:[#allocation7 + $0x60] sm:$0xff]
    %v187 = vld [vmem:[#allocation7 + $0x68] sm:$0xff]
    %v188 = vld [vmem:[#allocation7 + $0x70] sm:$0xff]
    %v189 = vld [vmem:[#allocation7 + $0x78] sm:$0xff]
    %v190 = vld [vmem:[%s4] sm:$0x1]
    %v192 = vlaneseq
    %v193 = vshrl.u32 %v192, 7
    %v194 = vsub.s32 0, %v193
    %v195 = vrot.slane %v190, %v194
    %197 = vmatprep.subr.mxu0 0.0
    %198 = vmatpush1.msra.mxu0 %v174
    %199 = vmatprep.subr.mxu0 0.0
    %200 = vmatpush1.msra.mxu0 %v175
    %201 = vmatprep.subr.mxu0 0.0
    %202 = vmatpush1.msra.mxu0 %v176
    %203 = vmatprep.subr.mxu0 0.0
    %204 = vmatpush1.msra.mxu0 %v177
    %205 = vmatprep.subr.mxu0 0.0
    %206 = vmatpush1.msra.mxu0 %v178
    %207 = vmatprep.subr.mxu0 0.0
    %208 = vmatpush1.msra.mxu0 %v179
    %209 = vmatprep.subr.mxu0 0.0
    %210 = vmatpush1.msra.mxu0 %v180
    %211 = vmatprep.subr.mxu0 0.0
    %212 = vmatpush1.msra.mxu0 %v181
    %213 = vmatprep.subr.mxu0 0.0
    %214 = vmatpush1.msra.mxu0 %v182
    %215 = vmatprep.subr.mxu0 0.0
    %216 = vmatpush1.msra.mxu0 %v183
    %217 = vmatprep.subr.mxu0 0.0
    %218 = vmatpush1.msra.mxu0 %v184
    %219 = vmatprep.subr.mxu0 0.0
    %220 = vmatpush1.msra.mxu0 %v185
    %221 = vmatprep.subr.mxu0 0.0
    %222 = vmatpush1.msra.mxu0 %v186
    %223 = vmatprep.subr.mxu0 0.0
    %224 = vmatpush1.msra.mxu0 %v187
    %225 = vmatprep.subr.mxu0 0.0
    %226 = vmatpush1.msra.mxu0 %v188
    %227 = vmatprep.subr.mxu0 0.0
    %228 = vmatpush1.msra.mxu0 %v189
    %229 = vmatprep.subr.mxu0 0.0
    %230 = vmatpush1.msra.mxu0 0.0
    %231 = vmatprep.subr.mxu0 0.0
    %232 = vmatpush1.msra.mxu0 0.0
    %233 = vmatprep.subr.mxu0 0.0
    %234 = vmatpush1.msra.mxu0 0.0
    %235 = vmatprep.subr.mxu0 0.0
    %236 = vmatpush1.msra.mxu0 0.0
    %237 = vmatprep.subr.mxu0 0.0
    %238 = vmatpush1.msra.mxu0 0.0
    %239 = vmatprep.subr.mxu0 0.0
    %240 = vmatpush1.msra.mxu0 0.0
    %241 = vmatprep.subr.mxu0 0.0
    %242 = vmatpush1.msra.mxu0 0.0
    %243 = vmatprep.subr.mxu0 0.0
    %244 = vmatpush1.msra.mxu0 0.0
    %245 = vmatprep.subr.mxu0 0.0
    %246 = vmatpush1.msra.mxu0 0.0
    %247 = vmatprep.subr.mxu0 0.0
    %248 = vmatpush1.msra.mxu0 0.0
    %249 = vmatprep.subr.mxu0 0.0
    %250 = vmatpush1.msra.mxu0 0.0
    %251 = vmatprep.subr.mxu0 0.0
    %252 = vmatpush1.msra.mxu0 0.0
    %253 = vmatprep.subr.mxu0 0.0
    %254 = vmatpush1.msra.mxu0 0.0
    %255 = vmatprep.subr.mxu0 0.0
    %256 = vmatpush1.msra.mxu0 0.0
    %257 = vmatprep.subr.mxu0 0.0
    %258 = vmatpush1.msra.mxu0 0.0
    %259 = vmatprep.subr.mxu0 0.0
    %260 = vmatpush1.msra.mxu0 0.0
    %261 = vmatprep.mubr.f32.mxu0 0.0
    %262 = vmatmul.mubr.f32.gmra.mrb[0].mxu0 %v171
    %v263 = vpop.f32.mrb[0].mxu0
    %v264 = vadd.f32 %v195, %v263
    %v265 = vpop.f32.mrb[0].mxu0
    %266 = vdwg.mxu0
    %v267 = vmax.f32 %v264, 0.0
    %v268 = vld [vmem:[#allocation8] sm:$0xff]
    %v269 = vld [vmem:[#allocation8 + $0x8] sm:$0xff]
    %v270 = vld [vmem:[#allocation8 + $0x10] sm:$0xff]
    %v271 = vld [vmem:[#allocation8 + $0x18] sm:$0xff]
    %v272 = vld [vmem:[#allocation8 + $0x20] sm:$0xff]
    %v273 = vld [vmem:[#allocation8 + $0x28] sm:$0xff]
    %v274 = vld [vmem:[#allocation8 + $0x30] sm:$0xff]
    %v275 = vld [vmem:[#allocation8 + $0x38] sm:$0xff]
    %v276 = vld [vmem:[#allocation8 + $0x40] sm:$0xff]
    %v277 = vld [vmem:[#allocation8 + $0x48] sm:$0xff]
    %v278 = vld [vmem:[#allocation8 + $0x50] sm:$0xff]
    %v279 = vld [vmem:[#allocation8 + $0x58] sm:$0xff]
    %v280 = vld [vmem:[#allocation8 + $0x60] sm:$0xff]
    %v281 = vld [vmem:[#allocation8 + $0x68] sm:$0xff]
    %v282 = vld [vmem:[#allocation8 + $0x70] sm:$0xff]
    %v283 = vld [vmem:[#allocation8 + $0x78] sm:$0xff]
    %v284 = vld [vmem:[%s6] sm:$0x1]
    %v286 = vlaneseq
    %v287 = vshrl.u32 %v286, 7
    %v288 = vsub.s32 0, %v287
    %v289 = vrot.slane %v284, %v288
    %291 = vmatprep.subr.mxu0 0.0
    %292 = vmatpush1.msra.mxu0 %v268
    %293 = vmatprep.subr.mxu0 0.0
    %294 = vmatpush1.msra.mxu0 %v269
    %295 = vmatprep.subr.mxu0 0.0
    %296 = vmatpush1.msra.mxu0 %v270
    %297 = vmatprep.subr.mxu0 0.0
    %298 = vmatpush1.msra.mxu0 %v271
    %299 = vmatprep.subr.mxu0 0.0
    %300 = vmatpush1.msra.mxu0 %v272
    %301 = vmatprep.subr.mxu0 0.0
    %302 = vmatpush1.msra.mxu0 %v273
    %303 = vmatprep.subr.mxu0 0.0
    %304 = vmatpush1.msra.mxu0 %v274
    %305 = vmatprep.subr.mxu0 0.0
    %306 = vmatpush1.msra.mxu0 %v275
    %307 = vmatprep.subr.mxu0 0.0
    %308 = vmatpush1.msra.mxu0 %v276
    %309 = vmatprep.subr.mxu0 0.0
    %310 = vmatpush1.msra.mxu0 %v277
    %311 = vmatprep.subr.mxu0 0.0
    %312 = vmatpush1.msra.mxu0 %v278
    %313 = vmatprep.subr.mxu0 0.0
    %314 = vmatpush1.msra.mxu0 %v279
    %315 = vmatprep.subr.mxu0 0.0
    %316 = vmatpush1.msra.mxu0 %v280
    %317 = vmatprep.subr.mxu0 0.0
    %318 = vmatpush1.msra.mxu0 %v281
    %319 = vmatprep.subr.mxu0 0.0
    %320 = vmatpush1.msra.mxu0 %v282
    %321 = vmatprep.subr.mxu0 0.0
    %322 = vmatpush1.msra.mxu0 %v283
    %323 = vmatprep.subr.mxu0 0.0
    %324 = vmatpush1.msra.mxu0 0.0
    %325 = vmatprep.subr.mxu0 0.0
    %326 = vmatpush1.msra.mxu0 0.0
    %327 = vmatprep.subr.mxu0 0.0
    %328 = vmatpush1.msra.mxu0 0.0
    %329 = vmatprep.subr.mxu0 0.0
    %330 = vmatpush1.msra.mxu0 0.0
    %331 = vmatprep.subr.mxu0 0.0
    %332 = vmatpush1.msra.mxu0 0.0
    %333 = vmatprep.subr.mxu0 0.0
    %334 = vmatpush1.msra.mxu0 0.0
    %335 = vmatprep.subr.mxu0 0.0
    %336 = vmatpush1.msra.mxu0 0.0
    %337 = vmatprep.subr.mxu0 0.0
    %338 = vmatpush1.msra.mxu0 0.0
    %339 = vmatprep.subr.mxu0 0.0
    %340 = vmatpush1.msra.mxu0 0.0
    %341 = vmatprep.subr.mxu0 0.0
    %342 = vmatpush1.msra.mxu0 0.0
    %343 = vmatprep.subr.mxu0 0.0
    %344 = vmatpush1.msra.mxu0 0.0
    %345 = vmatprep.subr.mxu0 0.0
    %346 = vmatpush1.msra.mxu0 0.0
    %347 = vmatprep.subr.mxu0 0.0
    %348 = vmatpush1.msra.mxu0 0.0
    %349 = vmatprep.subr.mxu0 0.0
    %350 = vmatpush1.msra.mxu0 0.0
    %351 = vmatprep.subr.mxu0 0.0
    %352 = vmatpush1.msra.mxu0 0.0
    %353 = vmatprep.subr.mxu0 0.0
    %354 = vmatpush1.msra.mxu0 0.0
    %355 = vmatprep.mubr.f32.mxu0 0.0
    %356 = vmatmul.mubr.f32.gmra.mrb[0].mxu0 %v267
    %v357 = vpop.f32.mrb[0].mxu0
    %v358 = vadd.f32 %v289, %v357
    %v359 = vpop.f32.mrb[0].mxu0
    %360 = vdwg.mxu0
    %v361 = vmax.f32 %v358, 0.0
    %v362 = vadd.f32 %v171, %v361
    %s363 = scalar_lea.vmem [#allocation7], 128
    %v364 = vld [vmem:[%s363] sm:$0xff]
    %v365 = vld [vmem:[%s363 + $0x8] sm:$0xff]
    %v366 = vld [vmem:[%s363 + $0x10] sm:$0xff]
    %v367 = vld [vmem:[%s363 + $0x18] sm:$0xff]
    %v368 = vld [vmem:[%s363 + $0x20] sm:$0xff]
    %v369 = vld [vmem:[%s363 + $0x28] sm:$0xff]
    %v370 = vld [vmem:[%s363 + $0x30] sm:$0xff]
    %v371 = vld [vmem:[%s363 + $0x38] sm:$0xff]
    %v372 = vld [vmem:[%s363 + $0x40] sm:$0xff]
    %v373 = vld [vmem:[%s363 + $0x48] sm:$0xff]
    %v374 = vld [vmem:[%s363 + $0x50] sm:$0xff]
    %v375 = vld [vmem:[%s363 + $0x58] sm:$0xff]
    %v376 = vld [vmem:[%s363 + $0x60] sm:$0xff]
    %v377 = vld [vmem:[%s363 + $0x68] sm:$0xff]
    %v378 = vld [vmem:[%s363 + $0x70] sm:$0xff]
    %v379 = vld [vmem:[%s363 + $0x78] sm:$0xff]
    %s380 = scalar_lea.vmem %s4, 1
    %v381 = vld [vmem:[%s380] sm:$0x1]
    %v383 = vlaneseq
    %v384 = vshrl.u32 %v383, 7
    %v385 = vsub.s32 0, %v384
    %v386 = vrot.slane %v381, %v385
    %388 = vmatprep.subr.mxu0 0.0
    %389 = vmatpush1.msra.mxu0 %v364
    %390 = vmatprep.subr.mxu0 0.0
    %391 = vmatpush1.msra.mxu0 %v365
    %392 = vmatprep.subr.mxu0 0.0
    %393 = vmatpush1.msra.mxu0 %v366
    %394 = vmatprep.subr.mxu0 0.0
    %395 = vmatpush1.msra.mxu0 %v367
    %396 = vmatprep.subr.mxu0 0.0
    %397 = vmatpush1.msra.mxu0 %v368
    %398 = vmatprep.subr.mxu0 0.0
    %399 = vmatpush1.msra.mxu0 %v369
    %400 = vmatprep.subr.mxu0 0.0
    %401 = vmatpush1.msra.mxu0 %v370
    %402 = vmatprep.subr.mxu0 0.0
    %403 = vmatpush1.msra.mxu0 %v371
    %404 = vmatprep.subr.mxu0 0.0
    %405 = vmatpush1.msra.mxu0 %v372
    %406 = vmatprep.subr.mxu0 0.0
    %407 = vmatpush1.msra.mxu0 %v373
    %408 = vmatprep.subr.mxu0 0.0
    %409 = vmatpush1.msra.mxu0 %v374
    %410 = vmatprep.subr.mxu0 0.0
    %411 = vmatpush1.msra.mxu0 %v375
    %412 = vmatprep.subr.mxu0 0.0
    %413 = vmatpush1.msra.mxu0 %v376
    %414 = vmatprep.subr.mxu0 0.0
    %415 = vmatpush1.msra.mxu0 %v377
    %416 = vmatprep.subr.mxu0 0.0
    %417 = vmatpush1.msra.mxu0 %v378
    %418 = vmatprep.subr.mxu0 0.0
    %419 = vmatpush1.msra.mxu0 %v379
    %420 = vmatprep.subr.mxu0 0.0
    %421 = vmatpush1.msra.mxu0 0.0
    %422 = vmatprep.subr.mxu0 0.0
    %423 = vmatpush1.msra.mxu0 0.0
    %424 = vmatprep.subr.mxu0 0.0
    %425 = vmatpush1.msra.mxu0 0.0
    %426 = vmatprep.subr.mxu0 0.0
    %427 = vmatpush1.msra.mxu0 0.0
    %428 = vmatprep.subr.mxu0 0.0
    %429 = vmatpush1.msra.mxu0 0.0
    %430 = vmatprep.subr.mxu0 0.0
    %431 = vmatpush1.msra.mxu0 0.0
    %432 = vmatprep.subr.mxu0 0.0
    %433 = vmatpush1.msra.mxu0 0.0
    %434 = vmatprep.subr.mxu0 0.0
    %435 = vmatpush1.msra.mxu0 0.0
    %436 = vmatprep.subr.mxu0 0.0
    %437 = vmatpush1.msra.mxu0 0.0
    %438 = vmatprep.subr.mxu0 0.0
    %439 = vmatpush1.msra.mxu0 0.0
    %440 = vmatprep.subr.mxu0 0.0
    %441 = vmatpush1.msra.mxu0 0.0
    %442 = vmatprep.subr.mxu0 0.0
    %443 = vmatpush1.msra.mxu0 0.0
    %444 = vmatprep.subr.mxu0 0.0
    %445 = vmatpush1.msra.mxu0 0.0
    %446 = vmatprep.subr.mxu0 0.0
    %447 = vmatpush1.msra.mxu0 0.0
    %448 = vmatprep.subr.mxu0 0.0
    %449 = vmatpush1.msra.mxu0 0.0
    %450 = vmatprep.subr.mxu0 0.0
    %451 = vmatpush1.msra.mxu0 0.0
    %452 = vmatprep.mubr.f32.mxu0 0.0
    %453 = vmatmul.mubr.f32.gmra.mrb[0].mxu0 %v362
    %v454 = vpop.f32.mrb[0].mxu0
    %v455 = vadd.f32 %v386, %v454
    %v456 = vpop.f32.mrb[0].mxu0
    %457 = vdwg.mxu0
    %v458 = vmax.f32 %v455, 0.0
    %s459 = scalar_lea.vmem [#allocation8], 128
    %v460 = vld [vmem:[%s459] sm:$0xff]
    %v461 = vld [vmem:[%s459 + $0x8] sm:$0xff]
    %v462 = vld [vmem:[%s459 + $0x10] sm:$0xff]
    %v463 = vld [vmem:[%s459 + $0x18] sm:$0xff]
    %v464 = vld [vmem:[%s459 + $0x20] sm:$0xff]
    %v465 = vld [vmem:[%s459 + $0x28] sm:$0xff]
    %v466 = vld [vmem:[%s459 + $0x30] sm:$0xff]
    %v467 = vld [vmem:[%s459 + $0x38] sm:$0xff]
    %v468 = vld [vmem:[%s459 + $0x40] sm:$0xff]
    %v469 = vld [vmem:[%s459 + $0x48] sm:$0xff]
    %v470 = vld [vmem:[%s459 + $0x50] sm:$0xff]
    %v471 = vld [vmem:[%s459 + $0x58] sm:$0xff]
    %v472 = vld [vmem:[%s459 + $0x60] sm:$0xff]
    %v473 = vld [vmem:[%s459 + $0x68] sm:$0xff]
    %v474 = vld [vmem:[%s459 + $0x70] sm:$0xff]
    %v475 = vld [vmem:[%s459 + $0x78] sm:$0xff]
    %s476 = scalar_lea.vmem %s6, 1
    %v477 = vld [vmem:[%s476] sm:$0x1]
    %v479 = vlaneseq
    %v480 = vshrl.u32 %v479, 7
    %v481 = vsub.s32 0, %v480
    %v482 = vrot.slane %v477, %v481
    %484 = vmatprep.subr.mxu0 0.0
    %485 = vmatpush1.msra.mxu0 %v460
    %486 = vmatprep.subr.mxu0 0.0
    %487 = vmatpush1.msra.mxu0 %v461
    %488 = vmatprep.subr.mxu0 0.0
    %489 = vmatpush1.msra.mxu0 %v462
    %490 = vmatprep.subr.mxu0 0.0
    %491 = vmatpush1.msra.mxu0 %v463
    %492 = vmatprep.subr.mxu0 0.0
    %493 = vmatpush1.msra.mxu0 %v464
    %494 = vmatprep.subr.mxu0 0.0
    %495 = vmatpush1.msra.mxu0 %v465
    %496 = vmatprep.subr.mxu0 0.0
    %497 = vmatpush1.msra.mxu0 %v466
    %498 = vmatprep.subr.mxu0 0.0
    %499 = vmatpush1.msra.mxu0 %v467
    %500 = vmatprep.subr.mxu0 0.0
    %501 = vmatpush1.msra.mxu0 %v468
    %502 = vmatprep.subr.mxu0 0.0
    %503 = vmatpush1.msra.mxu0 %v469
    %504 = vmatprep.subr.mxu0 0.0
    %505 = vmatpush1.msra.mxu0 %v470
    %506 = vmatprep.subr.mxu0 0.0
    %507 = vmatpush1.msra.mxu0 %v471
    %508 = vmatprep.subr.mxu0 0.0
    %509 = vmatpush1.msra.mxu0 %v472
    %510 = vmatprep.subr.mxu0 0.0
    %511 = vmatpush1.msra.mxu0 %v473
    %512 = vmatprep.subr.mxu0 0.0
    %513 = vmatpush1.msra.mxu0 %v474
    %514 = vmatprep.subr.mxu0 0.0
    %515 = vmatpush1.msra.mxu0 %v475
    %516 = vmatprep.subr.mxu0 0.0
    %517 = vmatpush1.msra.mxu0 0.0
    %518 = vmatprep.subr.mxu0 0.0
    %519 = vmatpush1.msra.mxu0 0.0
    %520 = vmatprep.subr.mxu0 0.0
    %521 = vmatpush1.msra.mxu0 0.0
    %522 = vmatprep.subr.mxu0 0.0
    %523 = vmatpush1.msra.mxu0 0.0
    %524 = vmatprep.subr.mxu0 0.0
    %525 = vmatpush1.msra.mxu0 0.0
    %526 = vmatprep.subr.mxu0 0.0
    %527 = vmatpush1.msra.mxu0 0.0
    %528 = vmatprep.subr.mxu0 0.0
    %529 = vmatpush1.msra.mxu0 0.0
    %530 = vmatprep.subr.mxu0 0.0
    %531 = vmatpush1.msra.mxu0 0.0
    %532 = vmatprep.subr.mxu0 0.0
    %533 = vmatpush1.msra.mxu0 0.0
    %534 = vmatprep.subr.mxu0 0.0
    %535 = vmatpush1.msra.mxu0 0.0
    %536 = vmatprep.subr.mxu0 0.0
    %537 = vmatpush1.msra.mxu0 0.0
    %538 = vmatprep.subr.mxu0 0.0
    %539 = vmatpush1.msra.mxu0 0.0
    %540 = vmatprep.subr.mxu0 0.0
    %541 = vmatpush1.msra.mxu0 0.0
    %542 = vmatprep.subr.mxu0 0.0
    %543 = vmatpush1.msra.mxu0 0.0
    %544 = vmatprep.subr.mxu0 0.0
    %545 = vmatpush1.msra.mxu0 0.0
    %546 = vmatprep.subr.mxu0 0.0
    %547 = vmatpush1.msra.mxu0 0.0
    %548 = vmatprep.mubr.f32.mxu0 0.0
    %549 = vmatmul.mubr.f32.gmra.mrb[0].mxu0 %v458
    %v550 = vpop.f32.mrb[0].mxu0
    %v551 = vadd.f32 %v482, %v550
    %v552 = vpop.f32.mrb[0].mxu0
    %553 = vdwg.mxu0
    %v554 = vmax.f32 %v551, 0.0
    %v555 = vadd.f32 %v362, %v554
    %556 = vst [vmem:[#allocation10] sm:$0xff] %v555
    // Predicated region
    $region46: #{tpu_custom_call.1} parent=1 // pred_check
      _
    $region47: #{tpu_custom_call.1} parent=1 // pred_check_branch
      %558 = sbr.rel (0) target = $region49
    $region48: #{tpu_custom_call.1} parent=1 // pred_region
      %s560 = ssub.s32 128, 128
      %561 = vsyncadd [#allocation4], %s560
      %s563 = sshll.u32 [#allocation10], 4
      %s564 = int_to_ptr.vmem [resolvable:$true] %s563
      %566 = dma.vmem_to_hbm [thread:$0]  %s564, 128, %s7, [#allocation4]
    $region49: #{tpu_custom_call.1} parent=1 // pred_fallthru
      _
    // Predicated region
    $region50: #{tpu_custom_call.1} parent=1 // pred_check
      _
    $region51: #{tpu_custom_call.1} parent=1 // pred_check_branch
      %568 = sbr.rel (0) target = $region53
    $region52: #{tpu_custom_call.1} parent=1 // pred_region
      %569 = dma.done [#allocation4], 128
    $region53: #{tpu_custom_call.1} parent=1 // pred_fallthru
      _
    %570 = vsyncpa [#allocation3], 1
    %571 = vsyncpa [#allocation6], 1
    %572 = vsyncpa [#allocation9], 1
    %573 = vsyncpa [#allocation4], 1

</llo_original>
